<compile_context>
chip_gen: v6e
topology: v6e:2x2x1
jax: 0.10.0
libtpu: 0.0.40
codegen_flags: <defaults>
</compile_context>

<pallas_src>
import functools

import jax
import jax.numpy as jnp
from jax.experimental import pallas as pl
from jax.experimental.pallas import tpu as pltpu

LANES = 128      # lane-dense padding target for channel-like dims
BN_EPS = 1e-5    # matches nn.BatchNorm2d default


def _sigmoid(v):
    # exp goes to the EUP; exact divide keeps the 2e-3 tolerance comfortable.
    return 1.0 / (1.0 + jnp.exp(-v))


# ---------------------------------------------------------------------------
# Pass 1: conv (im2col matmul, bf16 x bf16 -> f32) + per-sample pooled sums.
# ---------------------------------------------------------------------------
def conv_pool_kernel(patches_ref, wc_ref, bc_ref, y_ref, pool_ref):
    j = pl.program_id(1)
    y = jnp.dot(patches_ref[...], wc_ref[...],
                preferred_element_type=jnp.float32) + bc_ref[...]   # (T, Cp)
    y_ref[...] = y

    @pl.when(j == 0)
    def _():
        pool_ref[...] = jnp.zeros_like(pool_ref)

    pool_ref[...] += jnp.sum(y, axis=0, keepdims=True)              # (1, Cp)


# ---------------------------------------------------------------------------
# Pass 2: SCSE attention + single-pass BN partial statistics.
# ---------------------------------------------------------------------------
def scse_stats_kernel(y_ref, pool_ref, w1_ref, b1_ref, w2_ref, b2_ref,
                      ws_ref, bs_ref, att_ref, stats_ref, *, hw):
    j = pl.program_id(1)
    y = y_ref[...]                                                  # (T, Cp) f32

    # cSE channel gate: avgpool -> 1x1 conv -> ReLU -> 1x1 conv -> sigmoid.
    # Tiny (1,Cp)x(Cp,Crp) matmuls, recomputed per tile (negligible work).
    pooled = pool_ref[...] * (1.0 / hw)                             # (1, Cp)
    h = jnp.maximum(
        jnp.dot(pooled, w1_ref[...], preferred_element_type=jnp.float32)
        + b1_ref[...], 0.0)                                         # (1, Crp)
    cse = _sigmoid(
        jnp.dot(h, w2_ref[...], preferred_element_type=jnp.float32)
        + b2_ref[...])                                              # (1, Cp)

    # sSE spatial gate: per-pixel 1x1 conv to 1 channel -> sigmoid.
    sse = _sigmoid(jnp.sum(y * ws_ref[...], axis=-1, keepdims=True)
                   + bs_ref[0, 0])                                  # (T, 1)

    att = y * (cse + sse)                                           # fused combine
    att_ref[...] = att

    @pl.when(j == 0)
    def _():
        stats_ref[...] = jnp.zeros_like(stats_ref)

    stats_ref[...] += jnp.concatenate(
        [jnp.sum(att, axis=0, keepdims=True),
         jnp.sum(att * att, axis=0, keepdims=True)], axis=0)        # (2, Cp)


# ---------------------------------------------------------------------------
# Pass 3: BatchNorm (training-mode batch stats) finalize + affine + ReLU.
# ---------------------------------------------------------------------------
def bn_relu_kernel(att_ref, stats_ref, gamma_ref, beta_ref, out_ref, *, count):
    s = jnp.sum(stats_ref[...], axis=0)                  # (2, Cp) over samples
    inv = 1.0 / count
    mu = s[0:1, :] * inv                                 # (1, Cp)
    var = s[1:2, :] * inv - mu * mu                      # biased variance
    scale = gamma_ref[...] * jax.lax.rsqrt(var + BN_EPS)
    shift = beta_ref[...] - mu * scale
    out_ref[...] = jnp.maximum(att_ref[...] * scale + shift, 0.0)


# ---------------------------------------------------------------------------
# Pallas orchestration.
# ---------------------------------------------------------------------------
def decoder_block_pallas(patches_bf16, wc_p, bc_p, w1_p, b1_p, w2_p, b2_p,
                         ws_p, bs_p, gamma_p, beta_p, *, tile_hw):
    N, HW, K = patches_bf16.shape
    Cp = wc_p.shape[-1]
    Crp = w1_p.shape[-1]
    assert HW % tile_hw == 0, "tile_hw must divide OH*OW"
    n_hw = HW // tile_hw
    count = N * HW

    vmem_bytes = 32 * 1024 * 1024   # explicit budget; safe on v5e/v6e/v7x
    cp_acc = pltpu.CompilerParams(
        dimension_semantics=("parallel", "arbitrary"),
        vmem_limit_bytes=vmem_bytes)
    cp_par = pltpu.CompilerParams(
        dimension_semantics=("parallel", "parallel"),
        vmem_limit_bytes=vmem_bytes)

    # Row tiles of one sample: kernel sees lane-dense 2D (tile_hw, last) refs.
    def row_spec(last):
        return pl.BlockSpec((None, tile_hw, last), lambda i, j: (i, j, 0))

    # Per-sample accumulator / small per-sample block (constant over the HW axis).
    def samp_spec(rows, last):
        return pl.BlockSpec((None, rows, last), lambda i, j: (i, 0, 0))

    # Small resident parameter block (constant index -> DMA'd once).
    def full_spec(shape):
        return pl.BlockSpec(shape, lambda i, j: (0,) * len(shape))

    # ---- pass 1: conv + pooled sums ----
    y, pooled = pl.pallas_call(
        conv_pool_kernel,
        grid=(N, n_hw),
        in_specs=[row_spec(K), full_spec((K, Cp)), full_spec((1, Cp))],
        out_specs=(row_spec(Cp), samp_spec(1, Cp)),
        out_shape=(jax.ShapeDtypeStruct((N, HW, Cp), jnp.float32),
                   jax.ShapeDtypeStruct((N, 1, Cp), jnp.float32)),
        compiler_params=cp_acc,
    )(patches_bf16, wc_p, bc_p)

    # ---- pass 2: SCSE attention + BN partial stats ----
    att, stats = pl.pallas_call(
        functools.partial(scse_stats_kernel, hw=HW),
        grid=(N, n_hw),
        in_specs=[row_spec(Cp),
                  samp_spec(1, Cp),
                  full_spec((Cp, Crp)),
                  full_spec((1, Crp)),
                  full_spec((Crp, Cp)),
                  full_spec((1, Cp)),
                  full_spec((1, Cp)),
                  pl.BlockSpec(memory_space=pltpu.MemorySpace.SMEM)],  # scalar bs
        out_specs=(row_spec(Cp), samp_spec(2, Cp)),
        out_shape=(jax.ShapeDtypeStruct((N, HW, Cp), jnp.float32),
                   jax.ShapeDtypeStruct((N, 2, Cp), jnp.float32)),
        compiler_params=cp_acc,
    )(y, pooled, w1_p, b1_p, w2_p, b2_p, ws_p, bs_p)

    # ---- pass 3: BN finalize + ReLU ----
    out = pl.pallas_call(
        functools.partial(bn_relu_kernel, count=count),
        grid=(N, n_hw),
        in_specs=[row_spec(Cp),
                  pl.BlockSpec((N, 2, Cp), lambda i, j: (0, 0, 0)),
                  full_spec((1, Cp)),
                  full_spec((1, Cp))],
        out_specs=row_spec(Cp),
        out_shape=jax.ShapeDtypeStruct((N, HW, Cp), jnp.float32),
        compiler_params=cp_par,
    )(att, stats, gamma_p, beta_p)
    return out


# ---------------------------------------------------------------------------
# XLA-side glue: im2col, lane padding, NCHW <-> lane-dense slab layout.
# ---------------------------------------------------------------------------
def _im2col(x, KH, KW, stride, pad, dil, OH, OW):
    # TODO(synk): move im2col in-kernel (overlapping-window DMAs) to avoid the
    # KH*KW HBM read amplification at real decoder sizes.
    N, Cin, H, W = x.shape
    xp = jnp.pad(x, ((0, 0), (0, 0), (pad, pad), (pad, pad)))
    cols = []
    for kh in range(KH):
        for kw in range(KW):
            cols.append(xp[:, :,
                           kh * dil: kh * dil + (OH - 1) * stride + 1: stride,
                           kw * dil: kw * dil + (OW - 1) * stride + 1: stride])
    patches = jnp.stack(cols, axis=2)                 # (N, Cin, KH*KW, OH, OW)
    patches = patches.transpose(0, 3, 4, 1, 2)        # (N, OH, OW, Cin, KH*KW)
    return patches.reshape(N, OH * OW, Cin * KH * KW)


def _pad_lanes(a, width):
    return jnp.pad(a, [(0, 0)] * (a.ndim - 1) + [(0, width - a.shape[-1])])


def decoder_block_forward(x, wc, bc, w1, b1, w2, b2, ws, bs, gamma, beta,
                          *, stride, padding, dilation, tile_hw):
    N, Cin, H, W = x.shape
    Cout, _, KH, KW = wc.shape
    Cr = w1.shape[0]
    OH = (H + 2 * padding - dilation * (KH - 1) - 1) // stride + 1
    OW = (W + 2 * padding - dilation * (KW - 1) - 1) // stride + 1
    K = Cin * KH * KW
    Cp, Crp = LANES, LANES   # pad channel dims to the 128-lane axis

    patches = _im2col(x, KH, KW, stride, padding, dilation, OH, OW)
    patches = patches.astype(jnp.bfloat16)                           # halve DMA bytes

    wc_mat = wc.transpose(1, 2, 3, 0).reshape(K, Cout)               # (K, C), ci-major
    wc_p = _pad_lanes(wc_mat, Cp).astype(jnp.bfloat16)
    bc_p = _pad_lanes(bc.reshape(1, Cout), Cp)
    w1_p = jnp.pad(w1.T, ((0, Cp - Cout), (0, Crp - Cr)))            # (Cp, Crp)
    b1_p = _pad_lanes(b1.reshape(1, Cr), Crp)
    w2_p = jnp.pad(w2.T, ((0, Crp - Cr), (0, Cp - Cout)))            # (Crp, Cp)
    b2_p = _pad_lanes(b2.reshape(1, Cout), Cp)
    ws_p = _pad_lanes(ws.reshape(1, Cout), Cp)
    bs_p = bs.reshape(1, 1)
    gamma_p = _pad_lanes(gamma.reshape(1, Cout), Cp)
    beta_p = _pad_lanes(beta.reshape(1, Cout), Cp)

    out_p = decoder_block_pallas(patches, wc_p, bc_p, w1_p, b1_p, w2_p, b2_p,
                                 ws_p, bs_p, gamma_p, beta_p, tile_hw=tile_hw)
    return out_p[:, :, :Cout].reshape(N, OH, OW, Cout).transpose(0, 3, 1, 2)


if __name__ == "__main__":
    # DecoderBlock(in_channels=4, out_channels=32, kernel_size=3, padding=1)
    N, Cin, H, W = 2, 4, 16, 16
    Cout, KH, KW = 32, 3, 3
    stride, pad, dil = 1, 1, 1
    reduction = 16
    Cr = Cout // reduction

    key = jax.random.PRNGKey(0)
    ks = jax.random.split(key, 11)
    x = jax.random.normal(ks[0], (N, Cin, H, W), jnp.float32)
    wc = jax.random.normal(ks[1], (Cout, Cin, KH, KW), jnp.float32) * 0.2  # conv2d weight
    bc = jax.random.normal(ks[2], (Cout,), jnp.float32) * 0.1              # conv2d bias
    w1 = jax.random.normal(ks[3], (Cr, Cout), jnp.float32) * 0.2           # cSE conv1 (Cr,C,1,1)
    b1 = jax.random.normal(ks[4], (Cr,), jnp.float32) * 0.1
    w2 = jax.random.normal(ks[5], (Cout, Cr), jnp.float32) * 0.2           # cSE conv2 (C,Cr,1,1)
    b2 = jax.random.normal(ks[6], (Cout,), jnp.float32) * 0.1
    ws = jax.random.normal(ks[7], (Cout,), jnp.float32) * 0.2              # sSE conv (1,C,1,1)
    bs = jax.random.normal(ks[8], (), jnp.float32) * 0.1
    gamma = 1.0 + 0.1 * jax.random.normal(ks[9], (Cout,), jnp.float32)     # BN weight
    beta = 0.1 * jax.random.normal(ks[10], (Cout,), jnp.float32)           # BN bias

    fwd = jax.jit(functools.partial(decoder_block_forward,
                                    stride=stride, padding=pad, dilation=dil,
                                    tile_hw=128))
    out = fwd(x, wc, bc, w1, b1, w2, b2, ws, bs, gamma, beta)
    jax.block_until_ready(out)

    # ---- pure-JAX reference (same bf16-operand / f32-accumulation conv policy) ----
    y = jax.lax.conv_general_dilated(
        x.astype(jnp.bfloat16), wc.astype(jnp.bfloat16),
        (stride, stride), [(pad, pad), (pad, pad)],
        rhs_dilation=(dil, dil), dimension_numbers=("NCHW", "OIHW", "NCHW"),
        preferred_element_type=jnp.float32) + bc[None, :, None, None]
    pooled = y.mean(axis=(2, 3))
    hh = jnp.maximum(pooled @ w1.T + b1, 0.0)
    cse = jax.nn.sigmoid(hh @ w2.T + b2)
    sse = jax.nn.sigmoid(jnp.einsum("nchw,c->nhw", y, ws) + bs)
    att = y * cse[:, :, None, None] + y * sse[:, None, :, :]
    mu = att.mean(axis=(0, 2, 3), keepdims=True)
    var = ((att - mu) ** 2).mean(axis=(0, 2, 3), keepdims=True)
    ref = jnp.maximum((att - mu) / jnp.sqrt(var + BN_EPS)
                      * gamma[None, :, None, None] + beta[None, :, None, None], 0.0)

    err = float(jnp.max(jnp.abs(out - ref)))
    assert jnp.allclose(out, ref, atol=2e-3, rtol=2e-3), f"max abs err {err}"
    print("KERNEL_OK")
</pallas_src>

<mosaic_0001>
module attributes {stable_mosaic.version = 11 : i64} {
  func.func @conv_pool_kernel(%arg0: i32, %arg1: i32, %arg2: memref<1x128x36xbf16, #tpu.memory_space<vmem>>, %arg3: memref<36x128xbf16, #tpu.memory_space<vmem>>, %arg4: memref<1x128xf32, #tpu.memory_space<vmem>>, %arg5: memref<1x128x128xf32, #tpu.memory_space<vmem>>, %arg6: memref<1x1x128xf32, #tpu.memory_space<vmem>>) attributes {dimension_semantics = [#tpu.dimension_semantics<parallel>, #tpu.dimension_semantics<arbitrary>], iteration_bounds = array<i64: 2, 2>, scalar_prefetch = 0 : i64, scratch_operands = 0 : i64, tpu.core_type = #tpu.core_type<tc>, window_params = [{transform_indices = @transform_0, window_bounds = array<i64: 1, 128, 36>}, {pipeline_mode = #tpu.pipeline_mode<synchronous>, transform_indices = @transform_1, window_bounds = array<i64: 36, 128>}, {pipeline_mode = #tpu.pipeline_mode<synchronous>, transform_indices = @transform_2, window_bounds = array<i64: 1, 128>}, {transform_indices = @transform_3, window_bounds = array<i64: 1, 128, 128>}, {transform_indices = @transform_4, window_bounds = array<i64: 1, 1, 128>}]} {
    %c0 = arith.constant 0 : index
    %c0_0 = arith.constant 0 : index
    %c0_1 = arith.constant 0 : index
    %0 = vector.load %arg2[%c0, %c0_0, %c0_1] : memref<1x128x36xbf16, #tpu.memory_space<vmem>>, vector<1x128x36xbf16>
    %1 = vector.shape_cast %0 : vector<1x128x36xbf16> to vector<128x36xbf16>
    %c0_2 = arith.constant 0 : index
    %c0_3 = arith.constant 0 : index
    %2 = vector.load %arg3[%c0_2, %c0_3] : memref<36x128xbf16, #tpu.memory_space<vmem>>, vector<36x128xbf16>
    %cst = arith.constant dense<0.000000e+00> : vector<128x128xf32>
    %3 = tpu.matmul %1, %2, %cst {dimension_numbers = #tpu.dot_dimension_numbers<[1], [0], [0], [1], [0, 0, 1, 1], [], []>} : vector<128x36xbf16>, vector<36x128xbf16>, vector<128x128xf32> -> vector<128x128xf32>
    %c0_4 = arith.constant 0 : index
    %c0_5 = arith.constant 0 : index
    %4 = vector.load %arg4[%c0_4, %c0_5] : memref<1x128xf32, #tpu.memory_space<vmem>>, vector<1x128xf32>
    %5 = vector.broadcast %4 : vector<1x128xf32> to vector<128x128xf32>
    %6 = arith.addf %3, %5 : vector<128x128xf32>
    %c0_6 = arith.constant 0 : index
    %c0_7 = arith.constant 0 : index
    %c0_8 = arith.constant 0 : index
    %7 = vector.load %arg5[%c0_6, %c0_7, %c0_8] : memref<1x128x128xf32, #tpu.memory_space<vmem>>, vector<1x128x128xf32>
    %8 = vector.shape_cast %7 : vector<1x128x128xf32> to vector<128x128xf32>
    %9 = vector.shape_cast %6 : vector<128x128xf32> to vector<1x128x128xf32>
    tpu.vector_store %arg5[%c0_6, %c0_7, %c0_8], %9 {strides = array<i32>} : memref<1x128x128xf32, #tpu.memory_space<vmem>>, vector<1x128x128xf32>,
    %c0_i32 = arith.constant 0 : i32
    %10 = arith.cmpi eq, %arg1, %c0_i32 : i32
    %11 = arith.extui %10 : i1 to i32
    %c0_i32_9 = arith.constant 0 : i32
    %12 = arith.cmpi ne, %11, %c0_i32_9 : i32
    scf.if %12 {
      %cst_17 = arith.constant 0.000000e+00 : f32
      %21 = vector.broadcast %cst_17 : f32 to vector<1x128xf32>
      %c0_18 = arith.constant 0 : index
      %c0_19 = arith.constant 0 : index
      %c0_20 = arith.constant 0 : index
      %22 = vector.load %arg6[%c0_18, %c0_19, %c0_20] : memref<1x1x128xf32, #tpu.memory_space<vmem>>, vector<1x1x128xf32>
      %23 = vector.shape_cast %22 : vector<1x1x128xf32> to vector<1x128xf32>
      %24 = vector.shape_cast %21 : vector<1x128xf32> to vector<1x1x128xf32>
      tpu.vector_store %arg6[%c0_18, %c0_19, %c0_20], %24 {strides = array<i32>} : memref<1x1x128xf32, #tpu.memory_space<vmem>>, vector<1x1x128xf32>,
    } else {
    }
    %c0_10 = arith.constant 0 : index
    %c0_11 = arith.constant 0 : index
    %c0_12 = arith.constant 0 : index
    %13 = vector.load %arg6[%c0_10, %c0_11, %c0_12] : memref<1x1x128xf32, #tpu.memory_space<vmem>>, vector<1x1x128xf32>
    %14 = vector.shape_cast %13 : vector<1x1x128xf32> to vector<1x128xf32>
    %cst_13 = arith.constant dense<0.000000e+00> : vector<128xf32>
    %15 = vector.multi_reduction <add>, %6, %cst_13 [0] : vector<128x128xf32> to vector<128xf32>
    %16 = vector.shape_cast %15 : vector<128xf32> to vector<1x128xf32>
    %17 = arith.addf %14, %16 : vector<1x128xf32>
    %c0_14 = arith.constant 0 : index
    %c0_15 = arith.constant 0 : index
    %c0_16 = arith.constant 0 : index
    %18 = vector.load %arg6[%c0_14, %c0_15, %c0_16] : memref<1x1x128xf32, #tpu.memory_space<vmem>>, vector<1x1x128xf32>
    %19 = vector.shape_cast %18 : vector<1x1x128xf32> to vector<1x128xf32>
    %20 = vector.shape_cast %17 : vector<1x128xf32> to vector<1x1x128xf32>
    tpu.vector_store %arg6[%c0_14, %c0_15, %c0_16], %20 {strides = array<i32>} : memref<1x1x128xf32, #tpu.memory_space<vmem>>, vector<1x1x128xf32>,
    return
  }
  func.func @transform_0(%arg0: i32, %arg1: i32) -> (i32, i32, i32) {
    %c0_i32 = arith.constant 0 : i32
    %c0_i32_0 = arith.constant 0 : i32
    return %arg0, %arg1, %c0_i32 : i32, i32, i32
  }
  func.func @transform_1(%arg0: i32, %arg1: i32) -> (i32, i32) {
    %c0_i32 = arith.constant 0 : i32
    %c0_i32_0 = arith.constant 0 : i32
    %c0_i32_1 = arith.constant 0 : i32
    return %c0_i32, %c0_i32_0 : i32, i32
  }
  func.func @transform_2(%arg0: i32, %arg1: i32) -> (i32, i32) {
    %c0_i32 = arith.constant 0 : i32
    %c0_i32_0 = arith.constant 0 : i32
    %c0_i32_1 = arith.constant 0 : i32
    return %c0_i32, %c0_i32_0 : i32, i32
  }
  func.func @transform_3(%arg0: i32, %arg1: i32) -> (i32, i32, i32) {
    %c0_i32 = arith.constant 0 : i32
    %c0_i32_0 = arith.constant 0 : i32
    return %arg0, %arg1, %c0_i32 : i32, i32, i32
  }
  func.func @transform_4(%arg0: i32, %arg1: i32) -> (i32, i32, i32) {
    %c0_i32 = arith.constant 0 : i32
    %c0_i32_0 = arith.constant 0 : i32
    %c0_i32_1 = arith.constant 0 : i32
    return %arg0, %c0_i32, %c0_i32_0 : i32, i32, i32
  }
}

module attributes {stable_mosaic.version = 11 : i64} {
  func.func @bn_relu_kernel(%arg0: i32, %arg1: i32, %arg2: memref<1x128x128xf32, #tpu.memory_space<vmem>>, %arg3: memref<2x2x128xf32, #tpu.memory_space<vmem>>, %arg4: memref<1x128xf32, #tpu.memory_space<vmem>>, %arg5: memref<1x128xf32, #tpu.memory_space<vmem>>, %arg6: memref<1x128x128xf32, #tpu.memory_space<vmem>>) attributes {dimension_semantics = [#tpu.dimension_semantics<parallel>, #tpu.dimension_semantics<parallel>], iteration_bounds = array<i64: 2, 2>, scalar_prefetch = 0 : i64, scratch_operands = 0 : i64, tpu.core_type = #tpu.core_type<tc>, window_params = [{transform_indices = @transform_0, window_bounds = array<i64: 1, 128, 128>}, {pipeline_mode = #tpu.pipeline_mode<synchronous>, transform_indices = @transform_1, window_bounds = array<i64: 2, 2, 128>}, {pipeline_mode = #tpu.pipeline_mode<synchronous>, transform_indices = @transform_2, window_bounds = array<i64: 1, 128>}, {pipeline_mode = #tpu.pipeline_mode<synchronous>, transform_indices = @transform_3, window_bounds = array<i64: 1, 128>}, {transform_indices = @transform_4, window_bounds = array<i64: 1, 128, 128>}]} {
    %c0 = arith.constant 0 : index
    %c0_0 = arith.constant 0 : index
    %c0_1 = arith.constant 0 : index
    %0 = vector.load %arg3[%c0, %c0_0, %c0_1] : memref<2x2x128xf32, #tpu.memory_space<vmem>>, vector<2x2x128xf32>
    %cst = arith.constant dense<0.000000e+00> : vector<2x128xf32>
    %1 = vector.multi_reduction <add>, %0, %cst [0] : vector<2x2x128xf32> to vector<2x128xf32>
    %2 = vector.extract_strided_slice %1 {offsets = [0, 0], sizes = [1, 128], strides = [1, 1]} : vector<2x128xf32> to vector<1x128xf32>
    %cst_2 = arith.constant 0.001953125 : f32
    %3 = vector.broadcast %cst_2 : f32 to vector<1x128xf32>
    %4 = arith.mulf %2, %3 : vector<1x128xf32>
    %5 = vector.extract_strided_slice %1 {offsets = [1, 0], sizes = [1, 128], strides = [1, 1]} : vector<2x128xf32> to vector<1x128xf32>
    %cst_3 = arith.constant 0.001953125 : f32
    %6 = vector.broadcast %cst_3 : f32 to vector<1x128xf32>
    %7 = arith.mulf %5, %6 : vector<1x128xf32>
    %8 = arith.mulf %4, %4 : vector<1x128xf32>
    %9 = arith.subf %7, %8 : vector<1x128xf32>
    %c0_4 = arith.constant 0 : index
    %c0_5 = arith.constant 0 : index
    %10 = vector.load %arg4[%c0_4, %c0_5] : memref<1x128xf32, #tpu.memory_space<vmem>>, vector<1x128xf32>
    %cst_6 = arith.constant 9.99999974E-6 : f32
    %11 = vector.broadcast %cst_6 : f32 to vector<1x128xf32>
    %12 = arith.addf %9, %11 : vector<1x128xf32>
    %13 = math.rsqrt %12 : vector<1x128xf32>
    %14 = arith.mulf %10, %13 : vector<1x128xf32>
    %c0_7 = arith.constant 0 : index
    %c0_8 = arith.constant 0 : index
    %15 = vector.load %arg5[%c0_7, %c0_8] : memref<1x128xf32, #tpu.memory_space<vmem>>, vector<1x128xf32>
    %16 = arith.mulf %4, %14 : vector<1x128xf32>
    %17 = arith.subf %15, %16 : vector<1x128xf32>
    %c0_9 = arith.constant 0 : index
    %c0_10 = arith.constant 0 : index
    %c0_11 = arith.constant 0 : index
    %18 = vector.load %arg2[%c0_9, %c0_10, %c0_11] : memref<1x128x128xf32, #tpu.memory_space<vmem>>, vector<1x128x128xf32>
    %19 = vector.shape_cast %18 : vector<1x128x128xf32> to vector<128x128xf32>
    %20 = vector.broadcast %14 : vector<1x128xf32> to vector<128x128xf32>
    %21 = arith.mulf %19, %20 : vector<128x128xf32>
    %22 = vector.broadcast %17 : vector<1x128xf32> to vector<128x128xf32>
    %23 = arith.addf %21, %22 : vector<128x128xf32>
    %cst_12 = arith.constant 0.000000e+00 : f32
    %24 = vector.broadcast %cst_12 : f32 to vector<128x128xf32>
    %25 = arith.maximumf %23, %24 : vector<128x128xf32>
    %c0_13 = arith.constant 0 : index
    %c0_14 = arith.constant 0 : index
    %c0_15 = arith.constant 0 : index
    %26 = vector.load %arg6[%c0_13, %c0_14, %c0_15] : memref<1x128x128xf32, #tpu.memory_space<vmem>>, vector<1x128x128xf32>
    %27 = vector.shape_cast %26 : vector<1x128x128xf32> to vector<128x128xf32>
    %28 = vector.shape_cast %25 : vector<128x128xf32> to vector<1x128x128xf32>
    tpu.vector_store %arg6[%c0_13, %c0_14, %c0_15], %28 {strides = array<i32>} : memref<1x128x128xf32, #tpu.memory_space<vmem>>, vector<1x128x128xf32>,
    return
  }
  func.func @transform_0(%arg0: i32, %arg1: i32) -> (i32, i32, i32) {
    %c0_i32 = arith.constant 0 : i32
    %c0_i32_0 = arith.constant 0 : i32
    return %arg0, %arg1, %c0_i32 : i32, i32, i32
  }
  func.func @transform_1(%arg0: i32, %arg1: i32) -> (i32, i32, i32) {
    %c0_i32 = arith.constant 0 : i32
    %c0_i32_0 = arith.constant 0 : i32
    %c0_i32_1 = arith.constant 0 : i32
    %c0_i32_2 = arith.constant 0 : i32
    return %c0_i32, %c0_i32_0, %c0_i32_1 : i32, i32, i32
  }
  func.func @transform_2(%arg0: i32, %arg1: i32) -> (i32, i32) {
    %c0_i32 = arith.constant 0 : i32
    %c0_i32_0 = arith.constant 0 : i32
    %c0_i32_1 = arith.constant 0 : i32
    return %c0_i32, %c0_i32_0 : i32, i32
  }
  func.func @transform_3(%arg0: i32, %arg1: i32) -> (i32, i32) {
    %c0_i32 = arith.constant 0 : i32
    %c0_i32_0 = arith.constant 0 : i32
    %c0_i32_1 = arith.constant 0 : i32
    return %c0_i32, %c0_i32_0 : i32, i32
  }
  func.func @transform_4(%arg0: i32, %arg1: i32) -> (i32, i32, i32) {
    %c0_i32 = arith.constant 0 : i32
    %c0_i32_0 = arith.constant 0 : i32
    return %arg0, %arg1, %c0_i32 : i32, i32, i32
  }
}

module attributes {stable_mosaic.version = 11 : i64} {
  func.func @scse_stats_kernel(%arg0: i32, %arg1: i32, %arg2: memref<1x128x128xf32, #tpu.memory_space<vmem>>, %arg3: memref<1x1x128xf32, #tpu.memory_space<vmem>>, %arg4: memref<128x128xf32, #tpu.memory_space<vmem>>, %arg5: memref<1x128xf32, #tpu.memory_space<vmem>>, %arg6: memref<128x128xf32, #tpu.memory_space<vmem>>, %arg7: memref<1x128xf32, #tpu.memory_space<vmem>>, %arg8: memref<1x128xf32, #tpu.memory_space<vmem>>, %arg9: memref<1x1xf32, #tpu.memory_space<smem>>, %arg10: memref<1x128x128xf32, #tpu.memory_space<vmem>>, %arg11: memref<1x2x128xf32, #tpu.memory_space<vmem>>) attributes {dimension_semantics = [#tpu.dimension_semantics<parallel>, #tpu.dimension_semantics<arbitrary>], iteration_bounds = array<i64: 2, 2>, scalar_prefetch = 0 : i64, scratch_operands = 0 : i64, tpu.core_type = #tpu.core_type<tc>, window_params = [{transform_indices = @transform_0, window_bounds = array<i64: 1, 128, 128>}, {transform_indices = @transform_1, window_bounds = array<i64: 1, 1, 128>}, {pipeline_mode = #tpu.pipeline_mode<synchronous>, transform_indices = @transform_2, window_bounds = array<i64: 128, 128>}, {pipeline_mode = #tpu.pipeline_mode<synchronous>, transform_indices = @transform_3, window_bounds = array<i64: 1, 128>}, {pipeline_mode = #tpu.pipeline_mode<synchronous>, transform_indices = @transform_4, window_bounds = array<i64: 128, 128>}, {pipeline_mode = #tpu.pipeline_mode<synchronous>, transform_indices = @transform_5, window_bounds = array<i64: 1, 128>}, {pipeline_mode = #tpu.pipeline_mode<synchronous>, transform_indices = @transform_6, window_bounds = array<i64: 1, 128>}, {transform_indices = @transform_7, window_bounds = array<i64: 1, 1>}, {transform_indices = @transform_8, window_bounds = array<i64: 1, 128, 128>}, {transform_indices = @transform_9, window_bounds = array<i64: 1, 2, 128>}]} {
    %c0 = arith.constant 0 : index
    %c0_0 = arith.constant 0 : index
    %c0_1 = arith.constant 0 : index
    %0 = vector.load %arg2[%c0, %c0_0, %c0_1] : memref<1x128x128xf32, #tpu.memory_space<vmem>>, vector<1x128x128xf32>
    %1 = vector.shape_cast %0 : vector<1x128x128xf32> to vector<128x128xf32>
    %c0_2 = arith.constant 0 : index
    %c0_3 = arith.constant 0 : index
    %c0_4 = arith.constant 0 : index
    %2 = vector.load %arg3[%c0_2, %c0_3, %c0_4] : memref<1x1x128xf32, #tpu.memory_space<vmem>>, vector<1x1x128xf32>
    %3 = vector.shape_cast %2 : vector<1x1x128xf32> to vector<1x128xf32>
    %cst = arith.constant 3.906250e-03 : f32
    %4 = vector.broadcast %cst : f32 to vector<1x128xf32>
    %5 = arith.mulf %3, %4 : vector<1x128xf32>
    %c0_5 = arith.constant 0 : index
    %c0_6 = arith.constant 0 : index
    %6 = vector.load %arg4[%c0_5, %c0_6] : memref<128x128xf32, #tpu.memory_space<vmem>>, vector<128x128xf32>
    %cst_7 = arith.constant dense<0.000000e+00> : vector<1x128xf32>
    %7 = tpu.matmul %5, %6, %cst_7 {dimension_numbers = #tpu.dot_dimension_numbers<[1], [0], [0], [1], [0, 0, 1, 1], [], []>} : vector<1x128xf32>, vector<128x128xf32>, vector<1x128xf32> -> vector<1x128xf32>
    %c0_8 = arith.constant 0 : index
    %c0_9 = arith.constant 0 : index
    %8 = vector.load %arg5[%c0_8, %c0_9] : memref<1x128xf32, #tpu.memory_space<vmem>>, vector<1x128xf32>
    %9 = arith.addf %7, %8 : vector<1x128xf32>
    %cst_10 = arith.constant 0.000000e+00 : f32
    %10 = vector.broadcast %cst_10 : f32 to vector<1x128xf32>
    %11 = arith.maximumf %9, %10 : vector<1x128xf32>
    %c0_11 = arith.constant 0 : index
    %c0_12 = arith.constant 0 : index
    %12 = vector.load %arg6[%c0_11, %c0_12] : memref<128x128xf32, #tpu.memory_space<vmem>>, vector<128x128xf32>
    %cst_13 = arith.constant dense<0.000000e+00> : vector<1x128xf32>
    %13 = tpu.matmul %11, %12, %cst_13 {dimension_numbers = #tpu.dot_dimension_numbers<[1], [0], [0], [1], [0, 0, 1, 1], [], []>} : vector<1x128xf32>, vector<128x128xf32>, vector<1x128xf32> -> vector<1x128xf32>
    %c0_14 = arith.constant 0 : index
    %c0_15 = arith.constant 0 : index
    %14 = vector.load %arg7[%c0_14, %c0_15] : memref<1x128xf32, #tpu.memory_space<vmem>>, vector<1x128xf32>
    %15 = arith.addf %13, %14 : vector<1x128xf32>
    %cst_16 = arith.constant 0.000000e+00 : f32
    %16 = vector.broadcast %cst_16 : f32 to vector<1x128xf32>
    %17 = arith.subf %16, %15 : vector<1x128xf32>
    %18 = math.exp %17 : vector<1x128xf32>
    %cst_17 = arith.constant 1.000000e+00 : f32
    %19 = vector.broadcast %cst_17 : f32 to vector<1x128xf32>
    %20 = arith.addf %19, %18 : vector<1x128xf32>
    %cst_18 = arith.constant 1.000000e+00 : f32
    %21 = vector.broadcast %cst_18 : f32 to vector<1x128xf32>
    %22 = arith.divf %21, %20 : vector<1x128xf32>
    %c0_19 = arith.constant 0 : index
    %c0_20 = arith.constant 0 : index
    %23 = vector.load %arg8[%c0_19, %c0_20] : memref<1x128xf32, #tpu.memory_space<vmem>>, vector<1x128xf32>
    %24 = vector.broadcast %23 : vector<1x128xf32> to vector<128x128xf32>
    %25 = arith.mulf %1, %24 : vector<128x128xf32>
    %cst_21 = arith.constant dense<0.000000e+00> : vector<128xf32>
    %26 = vector.multi_reduction <add>, %25, %cst_21 [1] : vector<128x128xf32> to vector<128xf32>
    %27 = vector.shape_cast %26 : vector<128xf32> to vector<128x1xf32>
    %c0_22 = arith.constant 0 : index
    %c0_23 = arith.constant 0 : index
    %28 = memref.load %arg9[%c0_22, %c0_23] : memref<1x1xf32, #tpu.memory_space<smem>>
    %29 = vector.broadcast %28 : f32 to vector<128x1xf32>
    %30 = arith.addf %27, %29 : vector<128x1xf32>
    %cst_24 = arith.constant 0.000000e+00 : f32
    %31 = vector.broadcast %cst_24 : f32 to vector<128x1xf32>
    %32 = arith.subf %31, %30 : vector<128x1xf32>
    %33 = math.exp %32 : vector<128x1xf32>
    %cst_25 = arith.constant 1.000000e+00 : f32
    %34 = vector.broadcast %cst_25 : f32 to vector<128x1xf32>
    %35 = arith.addf %34, %33 : vector<128x1xf32>
    %cst_26 = arith.constant 1.000000e+00 : f32
    %36 = vector.broadcast %cst_26 : f32 to vector<128x1xf32>
    %37 = arith.divf %36, %35 : vector<128x1xf32>
    %38 = vector.broadcast %22 : vector<1x128xf32> to vector<128x128xf32>
    %39 = vector.broadcast %37 : vector<128x1xf32> to vector<128x128xf32>
    %40 = arith.addf %38, %39 : vector<128x128xf32>
    %41 = arith.mulf %1, %40 : vector<128x128xf32>
    %c0_27 = arith.constant 0 : index
    %c0_28 = arith.constant 0 : index
    %c0_29 = arith.constant 0 : index
    %42 = vector.load %arg10[%c0_27, %c0_28, %c0_29] : memref<1x128x128xf32, #tpu.memory_space<vmem>>, vector<1x128x128xf32>
    %43 = vector.shape_cast %42 : vector<1x128x128xf32> to vector<128x128xf32>
    %44 = vector.shape_cast %41 : vector<128x128xf32> to vector<1x128x128xf32>
    tpu.vector_store %arg10[%c0_27, %c0_28, %c0_29], %44 {strides = array<i32>} : memref<1x128x128xf32, #tpu.memory_space<vmem>>, vector<1x128x128xf32>,
    %c0_i32 = arith.constant 0 : i32
    %45 = arith.cmpi eq, %arg1, %c0_i32 : i32
    %46 = arith.extui %45 : i1 to i32
    %c0_i32_30 = arith.constant 0 : i32
    %47 = arith.cmpi ne, %46, %c0_i32_30 : i32
    scf.if %47 {
      %cst_39 = arith.constant 0.000000e+00 : f32
      %60 = vector.broadcast %cst_39 : f32 to vector<2x128xf32>
      %c0_40 = arith.constant 0 : index
      %c0_41 = arith.constant 0 : index
      %c0_42 = arith.constant 0 : index
      %61 = vector.load %arg11[%c0_40, %c0_41, %c0_42] : memref<1x2x128xf32, #tpu.memory_space<vmem>>, vector<1x2x128xf32>
      %62 = vector.shape_cast %61 : vector<1x2x128xf32> to vector<2x128xf32>
      %63 = vector.shape_cast %60 : vector<2x128xf32> to vector<1x2x128xf32>
      tpu.vector_store %arg11[%c0_40, %c0_41, %c0_42], %63 {strides = array<i32>} : memref<1x2x128xf32, #tpu.memory_space<vmem>>, vector<1x2x128xf32>,
    } else {
    }
    %c0_31 = arith.constant 0 : index
    %c0_32 = arith.constant 0 : index
    %c0_33 = arith.constant 0 : index
    %48 = vector.load %arg11[%c0_31, %c0_32, %c0_33] : memref<1x2x128xf32, #tpu.memory_space<vmem>>, vector<1x2x128xf32>
    %49 = vector.shape_cast %48 : vector<1x2x128xf32> to vector<2x128xf32>
    %cst_34 = arith.constant dense<0.000000e+00> : vector<128xf32>
    %50 = vector.multi_reduction <add>, %41, %cst_34 [0] : vector<128x128xf32> to vector<128xf32>
    %51 = vector.shape_cast %50 : vector<128xf32> to vector<1x128xf32>
    %52 = arith.mulf %41, %41 : vector<128x128xf32>
    %cst_35 = arith.constant dense<0.000000e+00> : vector<128xf32>
    %53 = vector.multi_reduction <add>, %52, %cst_35 [0] : vector<128x128xf32> to vector<128xf32>
    %54 = vector.shape_cast %53 : vector<128xf32> to vector<1x128xf32>
    %55 = tpu.concatenate %51, %54 in 0 : vector<1x128xf32>, vector<1x128xf32> -> vector<2x128xf32>
    %56 = arith.addf %49, %55 : vector<2x128xf32>
    %c0_36 = arith.constant 0 : index
    %c0_37 = arith.constant 0 : index
    %c0_38 = arith.constant 0 : index
    %57 = vector.load %arg11[%c0_36, %c0_37, %c0_38] : memref<1x2x128xf32, #tpu.memory_space<vmem>>, vector<1x2x128xf32>
    %58 = vector.shape_cast %57 : vector<1x2x128xf32> to vector<2x128xf32>
    %59 = vector.shape_cast %56 : vector<2x128xf32> to vector<1x2x128xf32>
    tpu.vector_store %arg11[%c0_36, %c0_37, %c0_38], %59 {strides = array<i32>} : memref<1x2x128xf32, #tpu.memory_space<vmem>>, vector<1x2x128xf32>,
    return
  }
  func.func @transform_0(%arg0: i32, %arg1: i32) -> (i32, i32, i32) {
    %c0_i32 = arith.constant 0 : i32
    %c0_i32_0 = arith.constant 0 : i32
    return %arg0, %arg1, %c0_i32 : i32, i32, i32
  }
  func.func @transform_1(%arg0: i32, %arg1: i32) -> (i32, i32, i32) {
    %c0_i32 = arith.constant 0 : i32
    %c0_i32_0 = arith.constant 0 : i32
    %c0_i32_1 = arith.constant 0 : i32
    return %arg0, %c0_i32, %c0_i32_0 : i32, i32, i32
  }
  func.func @transform_2(%arg0: i32, %arg1: i32) -> (i32, i32) {
    %c0_i32 = arith.constant 0 : i32
    %c0_i32_0 = arith.constant 0 : i32
    %c0_i32_1 = arith.constant 0 : i32
    return %c0_i32, %c0_i32_0 : i32, i32
  }
  func.func @transform_3(%arg0: i32, %arg1: i32) -> (i32, i32) {
    %c0_i32 = arith.constant 0 : i32
    %c0_i32_0 = arith.constant 0 : i32
    %c0_i32_1 = arith.constant 0 : i32
    return %c0_i32, %c0_i32_0 : i32, i32
  }
  func.func @transform_4(%arg0: i32, %arg1: i32) -> (i32, i32) {
    %c0_i32 = arith.constant 0 : i32
    %c0_i32_0 = arith.constant 0 : i32
    %c0_i32_1 = arith.constant 0 : i32
    return %c0_i32, %c0_i32_0 : i32, i32
  }
  func.func @transform_5(%arg0: i32, %arg1: i32) -> (i32, i32) {
    %c0_i32 = arith.constant 0 : i32
    %c0_i32_0 = arith.constant 0 : i32
    %c0_i32_1 = arith.constant 0 : i32
    return %c0_i32, %c0_i32_0 : i32, i32
  }
  func.func @transform_6(%arg0: i32, %arg1: i32) -> (i32, i32) {
    %c0_i32 = arith.constant 0 : i32
    %c0_i32_0 = arith.constant 0 : i32
    %c0_i32_1 = arith.constant 0 : i32
    return %c0_i32, %c0_i32_0 : i32, i32
  }
  func.func @transform_7(%arg0: i32, %arg1: i32) -> (i32, i32) {
    %c0_i32 = arith.constant 0 : i32
    %c0_i32_0 = arith.constant 0 : i32
    %c0_i32_1 = arith.constant 0 : i32
    return %c0_i32, %c0_i32_0 : i32, i32
  }
  func.func @transform_8(%arg0: i32, %arg1: i32) -> (i32, i32, i32) {
    %c0_i32 = arith.constant 0 : i32
    %c0_i32_0 = arith.constant 0 : i32
    return %arg0, %arg1, %c0_i32 : i32, i32, i32
  }
  func.func @transform_9(%arg0: i32, %arg1: i32) -> (i32, i32, i32) {
    %c0_i32 = arith.constant 0 : i32
    %c0_i32_0 = arith.constant 0 : i32
    %c0_i32_1 = arith.constant 0 : i32
    return %arg0, %c0_i32, %c0_i32_0 : i32, i32, i32
  }
}

</mosaic_0001>

<llo_original>
// kernel: decoder_block_forward.5
$region0: #{decoder_block_forward.5}
  #allocation0 [shape = 'u32[]', space=smem, size = 0x4, offset = 0x4, fixed_abs, tag = 'smem constant byte address 0x4 - core index']
  #allocation1 [shape = 'u32[144,128]{1,0:T(1,128)}', space=vmem, size = 0x12000, scoped, tag = 'internal scratch']
  %s0 = inlined_call_operand.vmem [shape: f32[2,256,128], index: 0, kind: input, shape index: {}]
  %s1 = inlined_call_operand.vmem [shape: f32[2,2,128], index: 1, kind: input, shape index: {}]
  %s2 = inlined_call_operand.vmem [shape: f32[1,128], index: 2, kind: input, shape index: {}]
  %s3 = inlined_call_operand.vmem [shape: f32[1,128], index: 3, kind: input, shape index: {}]
  %s4 = inlined_call_operand.hbm [shape: f32[2,256,128], index: 4, kind: output, shape index: {}]
  %s5 = sld [smem:[#allocation0]]
  $region49: #{decoder_block_forward.5} parent=0
    _
  %s7 = ssub.s32 1, %s5
  %s8 = scalar_select 0, %s7, %s5
  $region1: #{decoder_block_forward.5} parent=0
    #allocation2 [shape = 'u8[131072]{0}', space=vmem, size = 0x20000, scoped, tag = 'output window, operand 0']
    #allocation3 [shape = 's32[2]{0}', space=sflag, size = 0x8, scoped, tag = 'scoped memory for decoder_block_forward.5']
    %9 = vsyncpa [#allocation3], 0
    %s10 = scalar_lea.sflag [#allocation3], 1
    %11 = vsyncpa %s10, 0
    loop: start=0, step=1, limit=6
    $region2: #{decoder_block_forward.5} parent=1 // loop_pre_header
      _
    $region3: #{decoder_block_forward.5} parent=1 // loop_header
      %s13 = sphi 0, %s17
      %p14 = scmp.ge.s32.totalorder %s13, 6
      %s20 = sphi 0, %s32
      %s21 = sphi 0, %s28
      %s22 = sphi 0, %s20
      %s23 = sphi 0, %s21
      %s24 = sphi 0, %s22
      %s25 = sphi 0, %s23
      %s37 = sphi 0, %s39
      %s40 = sphi 0, %s37
      %s41 = sphi 0, %s40
      %s57 = sphi 0, %s41
      %s61 = sphi 0, %s61
      %s63 = sphi 0, %s61
      %s64 = sphi 0, %s63
      %s78 = sphi 0, %s64
      %s82 = sphi 0, %s82
      %s84 = sphi 0, %s82
      %s85 = sphi 0, %s84
      %s99 = sphi 0, %s85
      %s103 = sphi 0, %s103
      %s105 = sphi 0, %s103
      %s106 = sphi 0, %s105
      %s120 = sphi 0, %s106
      %s128 = sphi 0, %s130
      %s131 = sphi 0, %s128
      %s132 = sphi 0, %s131
      %s148 = sphi 0, %s132
    $region4: #{decoder_block_forward.5} parent=1 // loop_header_branch
      %16 = sbr.rel (%p14) target = $region8
    $region5: #{decoder_block_forward.5} parent=1 // loop_body
      %s18 = ssub.s32 %s13, 1
      %s19 = ssub.s32 %s13, 2
      %s26 = sadd.s32 1, %s21
      %p27 = scmp.ge.s32.totalorder %s26, 2
      %s28 = scalar_select %p27, 0, %s26
      %s29 = sadd.s32 1, %s20
      %s30 = scalar_select %p27, %s29, %s20
      %p31 = scmp.ge.s32.totalorder %s30, 2
      %s32 = scalar_select %p31, 0, %s30
      %s33 = ssub.s32 %s20, %s32
      %s34 = ssub.s32 %s21, %s28
      %s35 = sor.u32 %s33, %s34
      %p36 = scmp.eq.s32.totalorder %s35, 0
      %s38 = sadd.s32 %s37, 1
      %s39 = scalar_select %p36, %s37, %s38
      %p42 = pneg %p36
      %p43 = scmp.eq.s32.totalorder %s13, 3
      %p44 = por %p42, %p43
      %p45 = scmp.ne.s32.totalorder %s37, %s40
      %p46 = scmp.eq.s32.totalorder %s13, 0
      %p47 = por %p45, %p46
      %p48 = scmp.ne.s32.totalorder %s37, %s40
      %p49 = scmp.eq.s32.totalorder %s18, 3
      %p50 = por %p48, %p49
      %p51 = scmp.ne.s32.totalorder %s40, %s41
      %p52 = scmp.eq.s32.totalorder %s18, 0
      %p53 = por %p51, %p52
      %p54 = scmp.ne.s32.totalorder %s40, %s41
      %p55 = scmp.eq.s32.totalorder %s19, 3
      %p56 = por %p54, %p55
      %p58 = scmp.ne.s32.totalorder %s41, %s57
      %p59 = scmp.eq.s32.totalorder %s19, 0
      %p60 = por %p58, %p59
      %s62 = sadd.s32 %s61, 1
      %p65 = scmp.eq.s32.totalorder %s13, 3
      %p66 = scmp.ne.s32.totalorder %s61, %s63
      %p67 = scmp.eq.s32.totalorder %s13, 0
      %p68 = por %p66, %p67
      %p69 = scmp.ne.s32.totalorder %s61, %s63
      %p70 = scmp.eq.s32.totalorder %s18, 3
      %p71 = por %p69, %p70
      %p72 = scmp.ne.s32.totalorder %s63, %s64
      %p73 = scmp.eq.s32.totalorder %s18, 0
      %p74 = por %p72, %p73
      %p75 = scmp.ne.s32.totalorder %s63, %s64
      %p76 = scmp.eq.s32.totalorder %s19, 3
      %p77 = por %p75, %p76
      %p79 = scmp.ne.s32.totalorder %s64, %s78
      %p80 = scmp.eq.s32.totalorder %s19, 0
      %p81 = por %p79, %p80
      %s83 = sadd.s32 %s82, 1
      %p86 = scmp.eq.s32.totalorder %s13, 3
      %p87 = scmp.ne.s32.totalorder %s82, %s84
      %p88 = scmp.eq.s32.totalorder %s13, 0
      %p89 = por %p87, %p88
      %p90 = scmp.ne.s32.totalorder %s82, %s84
      %p91 = scmp.eq.s32.totalorder %s18, 3
      %p92 = por %p90, %p91
      %p93 = scmp.ne.s32.totalorder %s84, %s85
      %p94 = scmp.eq.s32.totalorder %s18, 0
      %p95 = por %p93, %p94
      %p96 = scmp.ne.s32.totalorder %s84, %s85
      %p97 = scmp.eq.s32.totalorder %s19, 3
      %p98 = por %p96, %p97
      %p100 = scmp.ne.s32.totalorder %s85, %s99
      %p101 = scmp.eq.s32.totalorder %s19, 0
      %p102 = por %p100, %p101
      %s104 = sadd.s32 %s103, 1
      %p107 = scmp.eq.s32.totalorder %s13, 3
      %p108 = scmp.ne.s32.totalorder %s103, %s105
      %p109 = scmp.eq.s32.totalorder %s13, 0
      %p110 = por %p108, %p109
      %p111 = scmp.ne.s32.totalorder %s103, %s105
      %p112 = scmp.eq.s32.totalorder %s18, 3
      %p113 = por %p111, %p112
      %p114 = scmp.ne.s32.totalorder %s105, %s106
      %p115 = scmp.eq.s32.totalorder %s18, 0
      %p116 = por %p114, %p115
      %p117 = scmp.ne.s32.totalorder %s105, %s106
      %p118 = scmp.eq.s32.totalorder %s19, 3
      %p119 = por %p117, %p118
      %p121 = scmp.ne.s32.totalorder %s106, %s120
      %p122 = scmp.eq.s32.totalorder %s19, 0
      %p123 = por %p121, %p122
      %s124 = ssub.s32 %s20, %s32
      %s125 = ssub.s32 %s21, %s28
      %s126 = sor.u32 %s124, %s125
      %p127 = scmp.eq.s32.totalorder %s126, 0
      %s129 = sadd.s32 %s128, 1
      %s130 = scalar_select %p127, %s128, %s129
      %p133 = pneg %p127
      %p134 = scmp.eq.s32.totalorder %s13, 3
      %p135 = por %p133, %p134
      %p136 = scmp.ne.s32.totalorder %s128, %s131
      %p137 = scmp.eq.s32.totalorder %s13, 0
      %p138 = por %p136, %p137
      %p139 = scmp.ne.s32.totalorder %s128, %s131
      %p140 = scmp.eq.s32.totalorder %s18, 3
      %p141 = por %p139, %p140
      %p142 = scmp.ne.s32.totalorder %s131, %s132
      %p143 = scmp.eq.s32.totalorder %s18, 0
      %p144 = por %p142, %p143
      %p145 = scmp.ne.s32.totalorder %s131, %s132
      %p146 = scmp.eq.s32.totalorder %s19, 3
      %p147 = por %p145, %p146
      %p149 = scmp.ne.s32.totalorder %s132, %s148
      %p150 = scmp.eq.s32.totalorder %s19, 0
      %p151 = por %p149, %p150
      %p152 = scmp.le.s32.totalorder 1, %s13
      %p153 = scmp.lt.s32.totalorder %s13, 5
      %p154 = pnand %p152, %p153
      %p155 = pneg %p154
      // Predicated region
      $region9: #{decoder_block_forward.5} parent=5 // pred_check
        _
      $region10: #{decoder_block_forward.5} parent=5 // pred_check_branch
        %157 = sbr.rel (%p154) target = $region12
      $region11: #{decoder_block_forward.5} parent=5 // pred_region
        %s158 = ssub.s32 %s13, 1
        // Predicated region
        $region13: #{decoder_block_forward.5} parent=11 // pred_check
          %p159 = pneg %p74
        $region14: #{decoder_block_forward.5} parent=11 // pred_check_branch
          %161 = sbr.rel (%p159) target = $region16
        $region15: #{decoder_block_forward.5} parent=11 // pred_region
          _
        $region16: #{decoder_block_forward.5} parent=11 // pred_fallthru
          _
        // Predicated region
        $region17: #{decoder_block_forward.5} parent=11 // pred_check
          %p162 = pneg %p95
        $region18: #{decoder_block_forward.5} parent=11 // pred_check_branch
          %164 = sbr.rel (%p162) target = $region20
        $region19: #{decoder_block_forward.5} parent=11 // pred_region
          _
        $region20: #{decoder_block_forward.5} parent=11 // pred_fallthru
          _
        // Predicated region
        $region21: #{decoder_block_forward.5} parent=11 // pred_check
          %p165 = pneg %p116
        $region22: #{decoder_block_forward.5} parent=11 // pred_check_branch
          %167 = sbr.rel (%p165) target = $region24
        $region23: #{decoder_block_forward.5} parent=11 // pred_region
          _
        $region24: #{decoder_block_forward.5} parent=11 // pred_fallthru
          _
      $region12: #{decoder_block_forward.5} parent=5 // pred_fallthru
        _
      %p168 = scmp.lt.s32.totalorder %s13, 4
      // Predicated region
      $region25: #{decoder_block_forward.5} parent=5 // pred_check
        %p169 = pneg %p168
      $region26: #{decoder_block_forward.5} parent=5 // pred_check_branch
        %171 = sbr.rel (%p169) target = $region28
      $region27: #{decoder_block_forward.5} parent=5 // pred_region
        // Predicated region
        $region29: #{decoder_block_forward.5} parent=27 // pred_check
          %p172 = pneg %p47
        $region30: #{decoder_block_forward.5} parent=27 // pred_check_branch
          %174 = sbr.rel (%p172) target = $region32
        $region31: #{decoder_block_forward.5} parent=27 // pred_region
          %s175 = smul.u32 16, %s21
          %p176 = scmp.lt.s32.totalorder %s20, 1
          %s177 = scalar_select %p176, %s20, 1
          %p178 = scmp.lt.s32.totalorder %s175, 31
          %s179 = scalar_select %p178, %s175, 31
          %s180 = smul.addr %s177, 32
          %s181 = sadd.s32 %s179, %s180
          %s182 = smul.addr %s181, 8
          %s183 = scalar_lea.vmem %s0, %s182
          %s184 = smul.u32 16, %s21
        $region32: #{decoder_block_forward.5} parent=27 // pred_fallthru
          _
      $region28: #{decoder_block_forward.5} parent=5 // pred_fallthru
        _
      %p185 = scmp.le.s32.totalorder 1, %s13
      %p186 = scmp.lt.s32.totalorder %s13, 5
      %p187 = pnand %p185, %p186
      %p188 = pneg %p187
      // Predicated region
      $region33: #{decoder_block_forward.5} parent=5 // pred_check
        _
      $region34: #{decoder_block_forward.5} parent=5 // pred_check_branch
        %190 = sbr.rel (%p187) target = $region36
      $region35: #{decoder_block_forward.5} parent=5 // pred_region
        %s191 = ssub.s32 %s13, 1
        %s192 = smul.u32 16, %s23
        %p193 = scmp.lt.s32.totalorder %s22, 1
        %s194 = scalar_select %p193, %s22, 1
        %p195 = scmp.lt.s32.totalorder %s192, 31
        %s196 = scalar_select %p195, %s192, 31
        %s197 = smul.addr %s194, 32
        %s198 = sadd.s32 %s196, %s197
        %s199 = smul.addr %s198, 8
        %s200 = scalar_lea.vmem %s0, %s199
        %p201 = pneg %p53
        %p202 = pneg %p50
        %p203 = pneg %p74
        %p204 = pneg %p71
        %p205 = pneg %p95
        %p206 = pneg %p92
        %p207 = pneg %p116
        %p208 = pneg %p113
        %p209 = pneg %p144
        %p210 = pneg %p141
        %s211 = sand.u32 %s131, 1
        %s212 = scalar_lea.sflag [#allocation3], %s211
        %s213 = sand.u32 %s131, 1
        %s214 = smul.addr %s213, 128
        %s215 = scalar_lea.vmem [#allocation2], %s214
        %s216 = smul.u32 16, %s23
        %p217 = scmp.lt.s32.totalorder %s22, 1
        %s218 = scalar_select %p217, %s22, 1
        %p219 = scmp.lt.s32.totalorder %s216, 31
        %s220 = scalar_select %p219, %s216, 31
        %s221 = smul.addr %s218, 32
        %s222 = sadd.s32 %s220, %s221
        %s223 = smul.addr %s222, 8
        %s224 = scalar_lea.vmem %s0, %s223
        %s225 = smul.u32 16, %s23
        %s226 = smul.u32 16, %s23
        %v227 = vld [vmem:[%s1] sm:$0x3]
        %v228 = vld [vmem:[%s1 + $0x2] sm:$0x3]
        %vm229 = vcmask 1041408
        %v230 = vsel %vm229, %v227, 0.0
        %v231 = vsel %vm229, %v228, 0.0
        %v232 = vadd.f32 %v230, %v231
        %v233 = vmul.f32 %v232, 0.001953125
        %v234 = vmul.f32 %v233, %v233
        %v236 = vrot.slane %v234, 7
        %v238 = vsub.f32 %v233, %v236
        %v239 = vld [vmem:[%s2] sm:$0x1]
        %v240 = vadd.f32 %v238, 1e-05
        %v241 = vrsqrt.pop %v240
        %v244 = vunpack.c.l.s4 1966171168
        %v245 = vunpack.c.0.s8 %v244
        %v246 = vlaneseq
        %v247 = vshrl.u32 %v246, 7
        %v248 = vsub.s32 %v245, %v247
        %v249 = vrot.slane %v241, %v248
        %v250 = vcombine.high %v249, %v249
        %v252 = vunpack.c.l.s4 1966171168
        %v253 = vunpack.c.0.s8 %v252
        %v254 = vlaneseq
        %v255 = vshrl.u32 %v254, 7
        %v256 = vsub.s32 %v253, %v255
        %v257 = vrot.slane %v250, %v256
        %v259 = vmul.f32 %v239, %v257
        %v260 = vld [vmem:[%s3] sm:$0x1]
        %v261 = vmul.f32 %v233, %v259
        %v262 = vsub.f32 %v260, %v261
        %v263 = vld [vmem:[%s224] sm:$0xff]
        %v264 = vld [vmem:[%s224 + $0x8] sm:$0xff]
        %v265 = vld [vmem:[%s224 + $0x10] sm:$0xff]
        %v266 = vld [vmem:[%s224 + $0x18] sm:$0xff]
        %v267 = vld [vmem:[%s224 + $0x20] sm:$0xff]
        %v268 = vld [vmem:[%s224 + $0x28] sm:$0xff]
        %v269 = vld [vmem:[%s224 + $0x30] sm:$0xff]
        %v270 = vld [vmem:[%s224 + $0x38] sm:$0xff]
        %v271 = vld [vmem:[%s224 + $0x40] sm:$0xff]
        %v272 = vld [vmem:[%s224 + $0x48] sm:$0xff]
        %v273 = vld [vmem:[%s224 + $0x50] sm:$0xff]
        %v274 = vld [vmem:[%s224 + $0x58] sm:$0xff]
        %v275 = vld [vmem:[%s224 + $0x60] sm:$0xff]
        %v276 = vld [vmem:[%s224 + $0x68] sm:$0xff]
        %v277 = vld [vmem:[%s224 + $0x70] sm:$0xff]
        %v278 = vld [vmem:[%s224 + $0x78] sm:$0xff]
        %v280 = vlaneseq
        %v281 = vshrl.u32 %v280, 7
        %v282 = vsub.s32 0, %v281
        %v283 = vrot.slane %v259, %v282
        %v285 = vmul.f32 %v263, %v283
        %v286 = vmul.f32 %v264, %v283
        %v287 = vmul.f32 %v265, %v283
        %v288 = vmul.f32 %v266, %v283
        %v289 = vmul.f32 %v267, %v283
        %v290 = vmul.f32 %v268, %v283
        %v291 = vmul.f32 %v269, %v283
        %v292 = vmul.f32 %v270, %v283
        %v293 = vmul.f32 %v271, %v283
        %v294 = vmul.f32 %v272, %v283
        %v295 = vmul.f32 %v273, %v283
        %v296 = vmul.f32 %v274, %v283
        %v297 = vmul.f32 %v275, %v283
        %v298 = vmul.f32 %v276, %v283
        %v299 = vmul.f32 %v277, %v283
        %v300 = vmul.f32 %v278, %v283
        %v302 = vlaneseq
        %v303 = vshrl.u32 %v302, 7
        %v304 = vsub.s32 0, %v303
        %v305 = vrot.slane %v262, %v304
        %v307 = vadd.f32 %v285, %v305
        %v308 = vadd.f32 %v286, %v305
        %v309 = vadd.f32 %v287, %v305
        %v310 = vadd.f32 %v288, %v305
        %v311 = vadd.f32 %v289, %v305
        %v312 = vadd.f32 %v290, %v305
        %v313 = vadd.f32 %v291, %v305
        %v314 = vadd.f32 %v292, %v305
        %v315 = vadd.f32 %v293, %v305
        %v316 = vadd.f32 %v294, %v305
        %v317 = vadd.f32 %v295, %v305
        %v318 = vadd.f32 %v296, %v305
        %v319 = vadd.f32 %v297, %v305
        %v320 = vadd.f32 %v298, %v305
        %v321 = vadd.f32 %v299, %v305
        %v322 = vadd.f32 %v300, %v305
        %v323 = vmax.f32 %v307, 0.0
        %v324 = vmax.f32 %v308, 0.0
        %v325 = vmax.f32 %v309, 0.0
        %v326 = vmax.f32 %v310, 0.0
        %v327 = vmax.f32 %v311, 0.0
        %v328 = vmax.f32 %v312, 0.0
        %v329 = vmax.f32 %v313, 0.0
        %v330 = vmax.f32 %v314, 0.0
        %v331 = vmax.f32 %v315, 0.0
        %v332 = vmax.f32 %v316, 0.0
        %v333 = vmax.f32 %v317, 0.0
        %v334 = vmax.f32 %v318, 0.0
        %v335 = vmax.f32 %v319, 0.0
        %v336 = vmax.f32 %v320, 0.0
        %v337 = vmax.f32 %v321, 0.0
        %v338 = vmax.f32 %v322, 0.0
        %339 = vst [vmem:[%s215] sm:$0xff] %v323
        %340 = vst [vmem:[%s215 + $0x8] sm:$0xff] %v324
        %341 = vst [vmem:[%s215 + $0x10] sm:$0xff] %v325
        %342 = vst [vmem:[%s215 + $0x18] sm:$0xff] %v326
        %343 = vst [vmem:[%s215 + $0x20] sm:$0xff] %v327
        %344 = vst [vmem:[%s215 + $0x28] sm:$0xff] %v328
        %345 = vst [vmem:[%s215 + $0x30] sm:$0xff] %v329
        %346 = vst [vmem:[%s215 + $0x38] sm:$0xff] %v330
        %347 = vst [vmem:[%s215 + $0x40] sm:$0xff] %v331
        %348 = vst [vmem:[%s215 + $0x48] sm:$0xff] %v332
        %349 = vst [vmem:[%s215 + $0x50] sm:$0xff] %v333
        %350 = vst [vmem:[%s215 + $0x58] sm:$0xff] %v334
        %351 = vst [vmem:[%s215 + $0x60] sm:$0xff] %v335
        %352 = vst [vmem:[%s215 + $0x68] sm:$0xff] %v336
        %353 = vst [vmem:[%s215 + $0x70] sm:$0xff] %v337
        %354 = vst [vmem:[%s215 + $0x78] sm:$0xff] %v338
        %s355 = sand.u32 %s131, 1
        %s356 = scalar_lea.sflag [#allocation3], %s355
        %s357 = sand.u32 %s131, 1
        %s358 = smul.addr %s357, 128
        %s359 = scalar_lea.vmem [#allocation2], %s358
        // Predicated region
        $region37: #{decoder_block_forward.5} parent=35 // pred_check
          %p360 = pneg %p141
        $region38: #{decoder_block_forward.5} parent=35 // pred_check_branch
          %362 = sbr.rel (%p360) target = $region40
        $region39: #{decoder_block_forward.5} parent=35 // pred_region
          %s363 = smul.u32 16, %s23
          %s365 = ssub.s32 2048, 2048
          %366 = vsyncadd %s356, %s365
          %s367 = smul.addr %s22, 32
          %s368 = sadd.s32 %s363, %s367
          %s369 = smul.addr %s368, 128
          %s370 = scalar_lea.hbm %s4, %s369
          %s371 = sshll.u32 %s359, 4
          %s372 = int_to_ptr.vmem [resolvable:$true] %s371
          %377 = dma.vmem_to_hbm [thread:$0]  %s372, 2048, %s370, %s356, 128, 128, 8
        $region40: #{decoder_block_forward.5} parent=35 // pred_fallthru
          _
      $region36: #{decoder_block_forward.5} parent=5 // pred_fallthru
        _
      %p378 = scmp.le.s32.totalorder 2, %s13
      // Predicated region
      $region41: #{decoder_block_forward.5} parent=5 // pred_check
        %p379 = pneg %p378
      $region42: #{decoder_block_forward.5} parent=5 // pred_check_branch
        %381 = sbr.rel (%p379) target = $region44
      $region43: #{decoder_block_forward.5} parent=5 // pred_region
        %s382 = ssub.s32 %s13, 2
        // Predicated region
        $region45: #{decoder_block_forward.5} parent=43 // pred_check
          %p383 = pneg %p147
        $region46: #{decoder_block_forward.5} parent=43 // pred_check_branch
          %385 = sbr.rel (%p383) target = $region48
        $region47: #{decoder_block_forward.5} parent=43 // pred_region
          %s386 = sand.u32 %s132, 1
          %s387 = scalar_lea.sflag [#allocation3], %s386
          %s388 = sand.u32 %s132, 1
          %s389 = smul.addr %s388, 128
          %s390 = scalar_lea.vmem [#allocation2], %s389
          %391 = dma.done %s387, 2048
        $region48: #{decoder_block_forward.5} parent=43 // pred_fallthru
          _
      $region44: #{decoder_block_forward.5} parent=5 // pred_fallthru
        _
    $region6: #{decoder_block_forward.5} parent=1 // loop_footer
      %s17 = sadd.s32 1, %s13
    $region7: #{decoder_block_forward.5} parent=1 // loop_footer_branch
      %12 = sbr.rel target = $region3
    $region8: #{decoder_block_forward.5} parent=1 // loop_exit
      _
    %392 = vsyncpa [#allocation3], 1
    %s393 = scalar_lea.sflag [#allocation3], 1
    %394 = vsyncpa %s393, 1

// kernel: decoder_block_forward.3
$region0: #{decoder_block_forward.3}
  #allocation0 [shape = 'u32[]', space=smem, size = 0x4, offset = 0x4, fixed_abs, tag = 'smem constant byte address 0x4 - core index']
  #allocation1 [shape = 'u32[144,128]{1,0:T(1,128)}', space=vmem, size = 0x12000, scoped, tag = 'internal scratch']
  %s0 = inlined_call_operand.vmem [shape: bf16[2,256,36], index: 0, kind: input, shape index: {}]
  %s1 = inlined_call_operand.vmem [shape: bf16[36,128], index: 1, kind: input, shape index: {}]
  %s2 = inlined_call_operand.vmem [shape: f32[1,128], index: 2, kind: input, shape index: {}]
  %s3 = inlined_call_operand.vmem [shape: f32[2,256,128], index: 3, kind: output, shape index: {0}]
  %s4 = inlined_call_operand.vmem [shape: f32[2,1,128], index: 4, kind: output, shape index: {1}]
  %5 = xla_tuple %s3, %s4
  %s6 = sld [smem:[#allocation0]]
  $region57: #{decoder_block_forward.3} parent=0
    _
  %s8 = ssub.s32 1, %s6
  %s9 = scalar_select 0, %s8, %s6
  loop: start=0, step=1, limit=6
  $region2: #{decoder_block_forward.3} parent=0 // loop_pre_header
    _
  $region3: #{decoder_block_forward.3} parent=0 // loop_header
    %s11 = sphi 0, %s15
    %p12 = scmp.ge.s32.totalorder %s11, 6
    %s18 = sphi 0, %s30
    %s19 = sphi 0, %s26
    %s20 = sphi 0, %s18
    %s21 = sphi 0, %s19
    %s22 = sphi 0, %s20
    %s23 = sphi 0, %s21
    %s35 = sphi 0, %s37
    %s38 = sphi 0, %s35
    %s39 = sphi 0, %s38
    %s55 = sphi 0, %s39
    %s59 = sphi 0, %s59
    %s61 = sphi 0, %s59
    %s62 = sphi 0, %s61
    %s76 = sphi 0, %s62
    %s80 = sphi 0, %s80
    %s82 = sphi 0, %s80
    %s83 = sphi 0, %s82
    %s97 = sphi 0, %s83
    %s105 = sphi 0, %s107
    %s108 = sphi 0, %s105
    %s109 = sphi 0, %s108
    %s125 = sphi 0, %s109
    %s131 = sphi 0, %s133
    %s134 = sphi 0, %s131
    %s135 = sphi 0, %s134
    %s151 = sphi 0, %s135
  $region4: #{decoder_block_forward.3} parent=0 // loop_header_branch
    %14 = sbr.rel (%p12) target = $region8
  $region5: #{decoder_block_forward.3} parent=0 // loop_body
    %s16 = ssub.s32 %s11, 1
    %s17 = ssub.s32 %s11, 2
    %s24 = sadd.s32 1, %s19
    %p25 = scmp.ge.s32.totalorder %s24, 2
    %s26 = scalar_select %p25, 0, %s24
    %s27 = sadd.s32 1, %s18
    %s28 = scalar_select %p25, %s27, %s18
    %p29 = scmp.ge.s32.totalorder %s28, 2
    %s30 = scalar_select %p29, 0, %s28
    %s31 = ssub.s32 %s18, %s30
    %s32 = ssub.s32 %s19, %s26
    %s33 = sor.u32 %s31, %s32
    %p34 = scmp.eq.s32.totalorder %s33, 0
    %s36 = sadd.s32 %s35, 1
    %s37 = scalar_select %p34, %s35, %s36
    %p40 = pneg %p34
    %p41 = scmp.eq.s32.totalorder %s11, 3
    %p42 = por %p40, %p41
    %p43 = scmp.ne.s32.totalorder %s35, %s38
    %p44 = scmp.eq.s32.totalorder %s11, 0
    %p45 = por %p43, %p44
    %p46 = scmp.ne.s32.totalorder %s35, %s38
    %p47 = scmp.eq.s32.totalorder %s16, 3
    %p48 = por %p46, %p47
    %p49 = scmp.ne.s32.totalorder %s38, %s39
    %p50 = scmp.eq.s32.totalorder %s16, 0
    %p51 = por %p49, %p50
    %p52 = scmp.ne.s32.totalorder %s38, %s39
    %p53 = scmp.eq.s32.totalorder %s17, 3
    %p54 = por %p52, %p53
    %p56 = scmp.ne.s32.totalorder %s39, %s55
    %p57 = scmp.eq.s32.totalorder %s17, 0
    %p58 = por %p56, %p57
    %s60 = sadd.s32 %s59, 1
    %p63 = scmp.eq.s32.totalorder %s11, 3
    %p64 = scmp.ne.s32.totalorder %s59, %s61
    %p65 = scmp.eq.s32.totalorder %s11, 0
    %p66 = por %p64, %p65
    %p67 = scmp.ne.s32.totalorder %s59, %s61
    %p68 = scmp.eq.s32.totalorder %s16, 3
    %p69 = por %p67, %p68
    %p70 = scmp.ne.s32.totalorder %s61, %s62
    %p71 = scmp.eq.s32.totalorder %s16, 0
    %p72 = por %p70, %p71
    %p73 = scmp.ne.s32.totalorder %s61, %s62
    %p74 = scmp.eq.s32.totalorder %s17, 3
    %p75 = por %p73, %p74
    %p77 = scmp.ne.s32.totalorder %s62, %s76
    %p78 = scmp.eq.s32.totalorder %s17, 0
    %p79 = por %p77, %p78
    %s81 = sadd.s32 %s80, 1
    %p84 = scmp.eq.s32.totalorder %s11, 3
    %p85 = scmp.ne.s32.totalorder %s80, %s82
    %p86 = scmp.eq.s32.totalorder %s11, 0
    %p87 = por %p85, %p86
    %p88 = scmp.ne.s32.totalorder %s80, %s82
    %p89 = scmp.eq.s32.totalorder %s16, 3
    %p90 = por %p88, %p89
    %p91 = scmp.ne.s32.totalorder %s82, %s83
    %p92 = scmp.eq.s32.totalorder %s16, 0
    %p93 = por %p91, %p92
    %p94 = scmp.ne.s32.totalorder %s82, %s83
    %p95 = scmp.eq.s32.totalorder %s17, 3
    %p96 = por %p94, %p95
    %p98 = scmp.ne.s32.totalorder %s83, %s97
    %p99 = scmp.eq.s32.totalorder %s17, 0
    %p100 = por %p98, %p99
    %s101 = ssub.s32 %s18, %s30
    %s102 = ssub.s32 %s19, %s26
    %s103 = sor.u32 %s101, %s102
    %p104 = scmp.eq.s32.totalorder %s103, 0
    %s106 = sadd.s32 %s105, 1
    %s107 = scalar_select %p104, %s105, %s106
    %p110 = pneg %p104
    %p111 = scmp.eq.s32.totalorder %s11, 3
    %p112 = por %p110, %p111
    %p113 = scmp.ne.s32.totalorder %s105, %s108
    %p114 = scmp.eq.s32.totalorder %s11, 0
    %p115 = por %p113, %p114
    %p116 = scmp.ne.s32.totalorder %s105, %s108
    %p117 = scmp.eq.s32.totalorder %s16, 3
    %p118 = por %p116, %p117
    %p119 = scmp.ne.s32.totalorder %s108, %s109
    %p120 = scmp.eq.s32.totalorder %s16, 0
    %p121 = por %p119, %p120
    %p122 = scmp.ne.s32.totalorder %s108, %s109
    %p123 = scmp.eq.s32.totalorder %s17, 3
    %p124 = por %p122, %p123
    %p126 = scmp.ne.s32.totalorder %s109, %s125
    %p127 = scmp.eq.s32.totalorder %s17, 0
    %p128 = por %p126, %p127
    %s129 = ssub.s32 %s18, %s30
    %p130 = scmp.eq.s32.totalorder %s129, 0
    %s132 = sadd.s32 %s131, 1
    %s133 = scalar_select %p130, %s131, %s132
    %p136 = pneg %p130
    %p137 = scmp.eq.s32.totalorder %s11, 3
    %p138 = por %p136, %p137
    %p139 = scmp.ne.s32.totalorder %s131, %s134
    %p140 = scmp.eq.s32.totalorder %s11, 0
    %p141 = por %p139, %p140
    %p142 = scmp.ne.s32.totalorder %s131, %s134
    %p143 = scmp.eq.s32.totalorder %s16, 3
    %p144 = por %p142, %p143
    %p145 = scmp.ne.s32.totalorder %s134, %s135
    %p146 = scmp.eq.s32.totalorder %s16, 0
    %p147 = por %p145, %p146
    %p148 = scmp.ne.s32.totalorder %s134, %s135
    %p149 = scmp.eq.s32.totalorder %s17, 3
    %p150 = por %p148, %p149
    %p152 = scmp.ne.s32.totalorder %s135, %s151
    %p153 = scmp.eq.s32.totalorder %s17, 0
    %p154 = por %p152, %p153
    %p155 = scmp.le.s32.totalorder 1, %s11
    %p156 = scmp.lt.s32.totalorder %s11, 5
    %p157 = pnand %p155, %p156
    %p158 = pneg %p157
    // Predicated region
    $region9: #{decoder_block_forward.3} parent=5 // pred_check
      _
    $region10: #{decoder_block_forward.3} parent=5 // pred_check_branch
      %160 = sbr.rel (%p157) target = $region12
    $region11: #{decoder_block_forward.3} parent=5 // pred_region
      %s161 = ssub.s32 %s11, 1
      // Predicated region
      $region13: #{decoder_block_forward.3} parent=11 // pred_check
        %p162 = pneg %p72
      $region14: #{decoder_block_forward.3} parent=11 // pred_check_branch
        %164 = sbr.rel (%p162) target = $region16
      $region15: #{decoder_block_forward.3} parent=11 // pred_region
        _
      $region16: #{decoder_block_forward.3} parent=11 // pred_fallthru
        _
      // Predicated region
      $region17: #{decoder_block_forward.3} parent=11 // pred_check
        %p165 = pneg %p93
      $region18: #{decoder_block_forward.3} parent=11 // pred_check_branch
        %167 = sbr.rel (%p165) target = $region20
      $region19: #{decoder_block_forward.3} parent=11 // pred_region
        _
      $region20: #{decoder_block_forward.3} parent=11 // pred_fallthru
        _
    $region12: #{decoder_block_forward.3} parent=5 // pred_fallthru
      _
    %p168 = scmp.lt.s32.totalorder %s11, 4
    // Predicated region
    $region21: #{decoder_block_forward.3} parent=5 // pred_check
      %p169 = pneg %p168
    $region22: #{decoder_block_forward.3} parent=5 // pred_check_branch
      %171 = sbr.rel (%p169) target = $region24
    $region23: #{decoder_block_forward.3} parent=5 // pred_region
      // Predicated region
      $region25: #{decoder_block_forward.3} parent=23 // pred_check
        %p172 = pneg %p45
      $region26: #{decoder_block_forward.3} parent=23 // pred_check_branch
        %174 = sbr.rel (%p172) target = $region28
      $region27: #{decoder_block_forward.3} parent=23 // pred_region
        %s175 = smul.u32 16, %s19
        %p176 = scmp.lt.s32.totalorder %s18, 1
        %s177 = scalar_select %p176, %s18, 1
        %p178 = scmp.lt.s32.totalorder %s175, 31
        %s179 = scalar_select %p178, %s175, 31
        %s180 = smul.addr %s177, 32
        %s181 = sadd.s32 %s179, %s180
        %s182 = smul.addr %s181, 4
        %s183 = scalar_lea.vmem %s0, %s182
        %s184 = smul.u32 16, %s19
      $region28: #{decoder_block_forward.3} parent=23 // pred_fallthru
        _
    $region24: #{decoder_block_forward.3} parent=5 // pred_fallthru
      _
    %p185 = scmp.le.s32.totalorder 1, %s11
    %p186 = scmp.lt.s32.totalorder %s11, 5
    %p187 = pnand %p185, %p186
    %p188 = pneg %p187
    // Predicated region
    $region29: #{decoder_block_forward.3} parent=5 // pred_check
      _
    $region30: #{decoder_block_forward.3} parent=5 // pred_check_branch
      %190 = sbr.rel (%p187) target = $region32
    $region31: #{decoder_block_forward.3} parent=5 // pred_region
      %s191 = ssub.s32 %s11, 1
      %s192 = smul.u32 16, %s21
      %p193 = scmp.lt.s32.totalorder %s20, 1
      %s194 = scalar_select %p193, %s20, 1
      %p195 = scmp.lt.s32.totalorder %s192, 31
      %s196 = scalar_select %p195, %s192, 31
      %s197 = smul.addr %s194, 32
      %s198 = sadd.s32 %s196, %s197
      %s199 = smul.addr %s198, 4
      %s200 = scalar_lea.vmem %s0, %s199
      %p201 = pneg %p51
      %p202 = pneg %p48
      %p203 = pneg %p72
      %p204 = pneg %p69
      %p205 = pneg %p93
      %p206 = pneg %p90
      %p207 = pneg %p121
      %p208 = pneg %p118
      %s209 = smul.u32 16, %s21
      %p210 = scmp.lt.s32.totalorder %s20, 1
      %s211 = scalar_select %p210, %s20, 1
      %p212 = scmp.lt.s32.totalorder %s209, 31
      %s213 = scalar_select %p212, %s209, 31
      %s214 = smul.addr %s211, 32
      %s215 = sadd.s32 %s213, %s214
      %s216 = smul.addr %s215, 8
      %s217 = scalar_lea.vmem %s3, %s216
      %p218 = pneg %p147
      %p219 = pneg %p144
      %p220 = scmp.lt.s32.totalorder %s20, 1
      %s221 = scalar_select %p220, %s20, 1
      %s222 = scalar_lea.vmem %s4, %s221
      %s223 = smul.u32 16, %s21
      %p224 = scmp.lt.s32.totalorder %s20, 1
      %s225 = scalar_select %p224, %s20, 1
      %p226 = scmp.lt.s32.totalorder %s223, 31
      %s227 = scalar_select %p226, %s223, 31
      %s228 = smul.addr %s225, 32
      %s229 = sadd.s32 %s227, %s228
      %s230 = smul.addr %s229, 4
      %s231 = scalar_lea.vmem %s0, %s230
      %s232 = smul.u32 16, %s21
      %s233 = smul.u32 16, %s21
      %p234 = scmp.lt.s32.totalorder %s20, 1
      %s235 = scalar_select %p234, %s20, 1
      %p236 = scmp.lt.s32.totalorder %s233, 31
      %s237 = scalar_select %p236, %s233, 31
      %s238 = smul.addr %s235, 32
      %s239 = sadd.s32 %s237, %s238
      %s240 = smul.addr %s239, 8
      %s241 = scalar_lea.vmem %s3, %s240
      %s242 = smul.u32 16, %s21
      %p243 = scmp.lt.s32.totalorder %s20, 1
      %s244 = scalar_select %p243, %s20, 1
      %s245 = scalar_lea.vmem %s4, %s244
      %v247 = vld [vmem:[%s231] sm:$0xf]
      %v248 = vld [vmem:[%s231 + $0x4] sm:$0xf]
      %v249 = vld [vmem:[%s231 + $0x8] sm:$0xf]
      %v250 = vld [vmem:[%s231 + $0xc] sm:$0xf]
      %v251 = vld [vmem:[%s231 + $0x10] sm:$0xf]
      %v252 = vld [vmem:[%s231 + $0x14] sm:$0xf]
      %v253 = vld [vmem:[%s231 + $0x18] sm:$0xf]
      %v254 = vld [vmem:[%s231 + $0x1c] sm:$0xf]
      %v255 = vld [vmem:[%s231 + $0x20] sm:$0xf]
      %v256 = vld [vmem:[%s231 + $0x24] sm:$0xf]
      %v257 = vld [vmem:[%s231 + $0x28] sm:$0xf]
      %v258 = vld [vmem:[%s231 + $0x2c] sm:$0xf]
      %v259 = vld [vmem:[%s231 + $0x30] sm:$0xf]
      %v260 = vld [vmem:[%s231 + $0x34] sm:$0xf]
      %v261 = vld [vmem:[%s231 + $0x38] sm:$0xf]
      %v262 = vld [vmem:[%s231 + $0x3c] sm:$0xf]
      %v263 = vld [vmem:[%s1] sm:$0xf]
      %v264 = vld [vmem:[%s1 + $0x4] sm:$0xf]
      %v265 = vld [vmem:[%s1 + $0x8] sm:$0xf]
      %v266 = vld [vmem:[%s1 + $0xc] sm:$0xf]
      %v267 = vld [vmem:[%s1 + $0x10] sm:$0x3]
      %v268 = vld [vmem:[%s2] sm:$0x1]
      %v270 = vlaneseq
      %v271 = vshrl.u32 %v270, 7
      %v272 = vsub.s32 0, %v271
      %v273 = vrot.slane %v268, %v272
      %v291 = vunpack.c.l.b16 %v247
      %v292 = vunpack.c.l.b16 %v248
      %v293 = vunpack.c.l.b16 %v249
      %v294 = vunpack.c.l.b16 %v250
      %v295 = vunpack.c.l.b16 %v251
      %v296 = vunpack.c.l.b16 %v252
      %v297 = vunpack.c.l.b16 %v253
      %v298 = vunpack.c.l.b16 %v254
      %v299 = vunpack.c.l.b16 %v255
      %v300 = vunpack.c.l.b16 %v256
      %v301 = vunpack.c.l.b16 %v257
      %v302 = vunpack.c.l.b16 %v258
      %v303 = vunpack.c.l.b16 %v259
      %v304 = vunpack.c.l.b16 %v260
      %v305 = vunpack.c.l.b16 %v261
      %v306 = vunpack.c.l.b16 %v262
      %v307 = vpack.c.b16 %v292, %v291
      %v308 = vpack.c.b16 %v294, %v293
      %v309 = vpack.c.b16 %v296, %v295
      %v310 = vpack.c.b16 %v298, %v297
      %v311 = vpack.c.b16 %v300, %v299
      %v312 = vpack.c.b16 %v302, %v301
      %v313 = vpack.c.b16 %v304, %v303
      %v314 = vpack.c.b16 %v306, %v305
      %v320 = vunpack.c.l.b16 %v263
      %v321 = vunpack.c.l.b16 %v264
      %v322 = vunpack.c.l.b16 %v265
      %v323 = vunpack.c.l.b16 %v266
      %v324 = vunpack.c.l.b16 %v267
      %v325 = vpack.c.b16 %v321, %v320
      %v326 = vpack.c.b16 %v323, %v322
      %v327 = vpack.c.b16 %v324, %v324
      %vm330 = vcmask 293888
      %v332 = vsel %vm330, %v307, 0
      %v335 = vsel %vm330, %v308, 0
      %v338 = vsel %vm330, %v309, 0
      %v341 = vsel %vm330, %v310, 0
      %v344 = vsel %vm330, %v311, 0
      %v347 = vsel %vm330, %v312, 0
      %v350 = vsel %vm330, %v313, 0
      %v353 = vsel %vm330, %v314, 0
      %vm355 = vcmask 1041408
      %v357 = vsel %vm355, %v327, 0
      %359 = vmatprep.subr.bf16.mxu0 0
      %360 = vmatpush1.bf16.msra.mxu0 0
      %361 = vmatprep.subr.bf16.mxu0 0
      %362 = vmatpush1.bf16.msra.mxu0 0
      %363 = vmatprep.subr.bf16.mxu0 0
      %364 = vmatpush1.bf16.msra.mxu0 0
      %365 = vmatprep.subr.bf16.mxu0 0
      %366 = vmatpush1.bf16.msra.mxu0 0
      %367 = vmatprep.subr.bf16.mxu0 0
      %368 = vmatpush1.bf16.msra.mxu0 0
      %369 = vmatprep.subr.bf16.mxu0 0
      %370 = vmatpush1.bf16.msra.mxu0 %v357
      %371 = vmatprep.subr.bf16.mxu0 0
      %372 = vmatpush1.bf16.msra.mxu0 %v326
      %373 = vmatprep.subr.bf16.mxu0 0
      %374 = vmatpush1.bf16.msra.mxu0 %v325
      %375 = vmatprep.subr.bf16.mxu0 0
      %376 = vmatpush2.bf16.msra.mxu0 0
      %377 = vmatprep.subr.bf16.mxu0 0
      %378 = vmatpush2.bf16.msra.mxu0 0
      %379 = vmatprep.subr.bf16.mxu0 0
      %380 = vmatpush2.bf16.msra.mxu0 0
      %381 = vmatprep.subr.bf16.mxu0 0
      %382 = vmatpush2.bf16.msra.mxu0 0
      %383 = vmatprep.subr.bf16.mxu0 0
      %384 = vmatpush2.bf16.msra.mxu0 0
      %385 = vmatprep.subr.bf16.mxu0 0
      %386 = vmatpush2.bf16.msra.mxu0 0
      %387 = vmatprep.subr.bf16.mxu0 0
      %388 = vmatpush2.bf16.msra.mxu0 0
      %389 = vmatprep.subr.bf16.mxu0 0
      %390 = vmatpush2.bf16.msra.mxu0 0
      %391 = vmatprep.mubr.bf16.mxu0 0
      %392 = vmatmul.mubr.bf16.gmra.mxu0 %v332
      %v393 = vpop.f32.mrf.mxu0
      %v394 = vadd.f32 %v273, %v393
      %v395 = vpop.f32.mrf.mxu0
      %v396 = vpop.f32.mrf.mxu0
      %v397 = vadd.f32 %v273, %v396
      %v398 = vpop.f32.mrf.mxu0
      %399 = vmatprep.mubr.bf16.mxu0 0
      %400 = vmatmul.mubr.bf16.gmra.mxu0 %v335
      %v401 = vpop.f32.mrf.mxu0
      %v402 = vadd.f32 %v273, %v401
      %v403 = vpop.f32.mrf.mxu0
      %v404 = vpop.f32.mrf.mxu0
      %v405 = vadd.f32 %v273, %v404
      %v406 = vpop.f32.mrf.mxu0
      %407 = vmatprep.mubr.bf16.mxu0 0
      %408 = vmatmul.mubr.bf16.gmra.mxu0 %v338
      %v409 = vpop.f32.mrf.mxu0
      %v410 = vadd.f32 %v273, %v409
      %v411 = vpop.f32.mrf.mxu0
      %v412 = vpop.f32.mrf.mxu0
      %v413 = vadd.f32 %v273, %v412
      %v414 = vpop.f32.mrf.mxu0
      %415 = vmatprep.mubr.bf16.mxu0 0
      %416 = vmatmul.mubr.bf16.gmra.mxu0 %v341
      %v417 = vpop.f32.mrf.mxu0
      %v418 = vadd.f32 %v273, %v417
      %v419 = vpop.f32.mrf.mxu0
      %v420 = vpop.f32.mrf.mxu0
      %v421 = vadd.f32 %v273, %v420
      %v422 = vpop.f32.mrf.mxu0
      %423 = vmatprep.mubr.bf16.mxu0 0
      %424 = vmatmul.mubr.bf16.gmra.mxu0 %v344
      %v425 = vpop.f32.mrf.mxu0
      %v426 = vadd.f32 %v273, %v425
      %v427 = vpop.f32.mrf.mxu0
      %v428 = vpop.f32.mrf.mxu0
      %v429 = vadd.f32 %v273, %v428
      %v430 = vpop.f32.mrf.mxu0
      %431 = vmatprep.mubr.bf16.mxu0 0
      %432 = vmatmul.mubr.bf16.gmra.mxu0 %v347
      %v433 = vpop.f32.mrf.mxu0
      %v434 = vadd.f32 %v273, %v433
      %v435 = vpop.f32.mrf.mxu0
      %v436 = vpop.f32.mrf.mxu0
      %v437 = vadd.f32 %v273, %v436
      %v438 = vpop.f32.mrf.mxu0
      %439 = vmatprep.mubr.bf16.mxu0 0
      %440 = vmatmul.mubr.bf16.gmra.mxu0 %v350
      %v441 = vpop.f32.mrf.mxu0
      %v442 = vadd.f32 %v273, %v441
      %v443 = vpop.f32.mrf.mxu0
      %v444 = vpop.f32.mrf.mxu0
      %v445 = vadd.f32 %v273, %v444
      %v446 = vpop.f32.mrf.mxu0
      %447 = vmatprep.mubr.bf16.mxu0 0
      %448 = vmatmul.mubr.bf16.gmra.mxu0 %v353
      %v449 = vpop.f32.mrf.mxu0
      %v450 = vadd.f32 %v273, %v449
      %v451 = vpop.f32.mrf.mxu0
      %v452 = vpop.f32.mrf.mxu0
      %v453 = vadd.f32 %v273, %v452
      %v454 = vpop.f32.mrf.mxu0
      %455 = vdwg.mxu0
      %456 = vst [vmem:[%s241] sm:$0xff] %v394
      %457 = vst [vmem:[%s241 + $0x8] sm:$0xff] %v397
      %458 = vst [vmem:[%s241 + $0x10] sm:$0xff] %v402
      %459 = vst [vmem:[%s241 + $0x18] sm:$0xff] %v405
      %460 = vst [vmem:[%s241 + $0x20] sm:$0xff] %v410
      %461 = vst [vmem:[%s241 + $0x28] sm:$0xff] %v413
      %462 = vst [vmem:[%s241 + $0x30] sm:$0xff] %v418
      %463 = vst [vmem:[%s241 + $0x38] sm:$0xff] %v421
      %464 = vst [vmem:[%s241 + $0x40] sm:$0xff] %v426
      %465 = vst [vmem:[%s241 + $0x48] sm:$0xff] %v429
      %466 = vst [vmem:[%s241 + $0x50] sm:$0xff] %v434
      %467 = vst [vmem:[%s241 + $0x58] sm:$0xff] %v437
      %468 = vst [vmem:[%s241 + $0x60] sm:$0xff] %v442
      %469 = vst [vmem:[%s241 + $0x68] sm:$0xff] %v445
      %470 = vst [vmem:[%s241 + $0x70] sm:$0xff] %v450
      %471 = vst [vmem:[%s241 + $0x78] sm:$0xff] %v453
      %p472 = scmp.eq.s32.totalorder %s21, 0
      // Predicated region
      $region33: #{decoder_block_forward.3} parent=31 // pred_check
        %p473 = pneg %p472
      $region34: #{decoder_block_forward.3} parent=31 // pred_check_branch
        %475 = sbr.rel (%p473) target = $region36
      $region35: #{decoder_block_forward.3} parent=31 // pred_region
        %476 = vst [vmem:[%s245] sm:$0x1] 0.0
      $region36: #{decoder_block_forward.3} parent=31 // pred_fallthru
        _
      %v477 = vld [vmem:[%s245] sm:$0x1]
      %v478 = vadd.f32 %v394, %v397
      %v479 = vadd.f32 %v478, %v402
      %v480 = vadd.f32 %v479, %v405
      %v481 = vadd.f32 %v480, %v410
      %v482 = vadd.f32 %v481, %v413
      %v483 = vadd.f32 %v482, %v418
      %v484 = vadd.f32 %v483, %v421
      %v485 = vadd.f32 %v484, %v426
      %v486 = vadd.f32 %v485, %v429
      %v487 = vadd.f32 %v486, %v434
      %v488 = vadd.f32 %v487, %v437
      %v489 = vadd.f32 %v488, %v442
      %v490 = vadd.f32 %v489, %v445
      %v491 = vadd.f32 %v490, %v450
      %v492 = vadd.f32 %v491, %v453
      %v493 = vrot.slane %v492, 4
      %v494 = vadd.f32 %v492, %v493
      %v495 = vrot.slane %v494, 2
      %v496 = vadd.f32 %v494, %v495
      %v497 = vrot.slane %v496, 1
      %v498 = vadd.f32 %v496, %v497
      %v499 = vadd.f32 %v477, %v498
      %500 = vst [vmem:[%s245] sm:$0x1] %v499
      %s501 = smul.u32 16, %s21
      %p502 = scmp.lt.s32.totalorder %s20, 1
      %s503 = scalar_select %p502, %s20, 1
      %p504 = scmp.lt.s32.totalorder %s501, 31
      %s505 = scalar_select %p504, %s501, 31
      %s506 = smul.addr %s503, 32
      %s507 = sadd.s32 %s505, %s506
      %s508 = smul.addr %s507, 8
      %s509 = scalar_lea.vmem %s3, %s508
      %p510 = scmp.lt.s32.totalorder %s20, 1
      %s511 = scalar_select %p510, %s20, 1
      %s512 = scalar_lea.vmem %s4, %s511
      // Predicated region
      $region37: #{decoder_block_forward.3} parent=31 // pred_check
        %p513 = pneg %p118
      $region38: #{decoder_block_forward.3} parent=31 // pred_check_branch
        %515 = sbr.rel (%p513) target = $region40
      $region39: #{decoder_block_forward.3} parent=31 // pred_region
        %s516 = smul.u32 16, %s21
      $region40: #{decoder_block_forward.3} parent=31 // pred_fallthru
        _
      // Predicated region
      $region41: #{decoder_block_forward.3} parent=31 // pred_check
        %p517 = pneg %p144
      $region42: #{decoder_block_forward.3} parent=31 // pred_check_branch
        %519 = sbr.rel (%p517) target = $region44
      $region43: #{decoder_block_forward.3} parent=31 // pred_region
        _
      $region44: #{decoder_block_forward.3} parent=31 // pred_fallthru
        _
    $region32: #{decoder_block_forward.3} parent=5 // pred_fallthru
      _
    %p520 = scmp.le.s32.totalorder 2, %s11
    // Predicated region
    $region45: #{decoder_block_forward.3} parent=5 // pred_check
      %p521 = pneg %p520
    $region46: #{decoder_block_forward.3} parent=5 // pred_check_branch
      %523 = sbr.rel (%p521) target = $region48
    $region47: #{decoder_block_forward.3} parent=5 // pred_region
      %s524 = ssub.s32 %s11, 2
      // Predicated region
      $region49: #{decoder_block_forward.3} parent=47 // pred_check
        %p525 = pneg %p124
      $region50: #{decoder_block_forward.3} parent=47 // pred_check_branch
        %527 = sbr.rel (%p525) target = $region52
      $region51: #{decoder_block_forward.3} parent=47 // pred_region
        %s528 = smul.u32 16, %s23
        %p529 = scmp.lt.s32.totalorder %s22, 1
        %s530 = scalar_select %p529, %s22, 1
        %p531 = scmp.lt.s32.totalorder %s528, 31
        %s532 = scalar_select %p531, %s528, 31
        %s533 = smul.addr %s530, 32
        %s534 = sadd.s32 %s532, %s533
        %s535 = smul.addr %s534, 8
        %s536 = scalar_lea.vmem %s3, %s535
      $region52: #{decoder_block_forward.3} parent=47 // pred_fallthru
        _
      // Predicated region
      $region53: #{decoder_block_forward.3} parent=47 // pred_check
        %p537 = pneg %p150
      $region54: #{decoder_block_forward.3} parent=47 // pred_check_branch
        %539 = sbr.rel (%p537) target = $region56
      $region55: #{decoder_block_forward.3} parent=47 // pred_region
        %p540 = scmp.lt.s32.totalorder %s22, 1
        %s541 = scalar_select %p540, %s22, 1
        %s542 = scalar_lea.vmem %s4, %s541
      $region56: #{decoder_block_forward.3} parent=47 // pred_fallthru
        _
    $region48: #{decoder_block_forward.3} parent=5 // pred_fallthru
      _
  $region6: #{decoder_block_forward.3} parent=0 // loop_footer
    %s15 = sadd.s32 1, %s11
  $region7: #{decoder_block_forward.3} parent=0 // loop_footer_branch
    %10 = sbr.rel target = $region3
  $region8: #{decoder_block_forward.3} parent=0 // loop_exit
    _

// kernel: decoder_block_forward.4
$region0: #{decoder_block_forward.4}
  #allocation0 [shape = 'u32[]', space=smem, size = 0x4, offset = 0x4, fixed_abs, tag = 'smem constant byte address 0x4 - core index']
  #allocation1 [shape = 'u32[144,128]{1,0:T(1,128)}', space=vmem, size = 0x12000, scoped, tag = 'internal scratch']
  #allocation2 [shape = 'f32[1,1]{1,0:T(1,128)S(6)}', space=smem, size = 0x200, scoped, tag = 'scoped memory for decoder_block_forward.4']
  %s0 = inlined_call_operand.vmem [shape: f32[2,256,128], index: 0, kind: input, shape index: {}]
  %s1 = inlined_call_operand.vmem [shape: f32[2,1,128], index: 1, kind: input, shape index: {}]
  %s2 = inlined_call_operand.vmem [shape: f32[128,128], index: 2, kind: input, shape index: {}]
  %s3 = inlined_call_operand.vmem [shape: f32[1,128], index: 3, kind: input, shape index: {}]
  %s4 = inlined_call_operand.vmem [shape: f32[128,128], index: 4, kind: input, shape index: {}]
  %s5 = inlined_call_operand.vmem [shape: f32[1,128], index: 5, kind: input, shape index: {}]
  %s6 = inlined_call_operand.vmem [shape: f32[1,128], index: 6, kind: input, shape index: {}]
  %s7 = inlined_call_operand.<no memory space> [shape: f32[1,1], index: 7, kind: input, shape index: {}]
  %s8 = inlined_call_operand.vmem [shape: f32[2,256,128], index: 8, kind: output, shape index: {0}]
  %s9 = inlined_call_operand.vmem [shape: f32[2,2,128], index: 9, kind: output, shape index: {1}]
  %10 = xla_tuple %s8, %s9
  %s11 = sld [smem:[#allocation0]]
  $region77: #{decoder_block_forward.4} parent=0
    _
  %s13 = ssub.s32 1, %s11
  %s14 = scalar_select 0, %s13, %s11
  %15 = sst [smem:[#allocation2]] %s7
  loop: start=0, step=1, limit=6
  $region2: #{decoder_block_forward.4} parent=0 // loop_pre_header
    _
  $region3: #{decoder_block_forward.4} parent=0 // loop_header
    %s17 = sphi 0, %s21
    %p18 = scmp.ge.s32.totalorder %s17, 6
    %s24 = sphi 0, %s36
    %s25 = sphi 0, %s32
    %s26 = sphi 0, %s24
    %s27 = sphi 0, %s25
    %s28 = sphi 0, %s26
    %s29 = sphi 0, %s27
    %s41 = sphi 0, %s43
    %s44 = sphi 0, %s41
    %s45 = sphi 0, %s44
    %s61 = sphi 0, %s45
    %s67 = sphi 0, %s69
    %s70 = sphi 0, %s67
    %s71 = sphi 0, %s70
    %s87 = sphi 0, %s71
    %s91 = sphi 0, %s91
    %s93 = sphi 0, %s91
    %s94 = sphi 0, %s93
    %s108 = sphi 0, %s94
    %s112 = sphi 0, %s112
    %s114 = sphi 0, %s112
    %s115 = sphi 0, %s114
    %s129 = sphi 0, %s115
    %s133 = sphi 0, %s133
    %s135 = sphi 0, %s133
    %s136 = sphi 0, %s135
    %s150 = sphi 0, %s136
    %s154 = sphi 0, %s154
    %s156 = sphi 0, %s154
    %s157 = sphi 0, %s156
    %s171 = sphi 0, %s157
    %s175 = sphi 0, %s175
    %s177 = sphi 0, %s175
    %s178 = sphi 0, %s177
    %s192 = sphi 0, %s178
    %s196 = sphi 0, %s196
    %s198 = sphi 0, %s196
    %s199 = sphi 0, %s198
    %s213 = sphi 0, %s199
    %s221 = sphi 0, %s223
    %s224 = sphi 0, %s221
    %s225 = sphi 0, %s224
    %s241 = sphi 0, %s225
    %s247 = sphi 0, %s249
    %s250 = sphi 0, %s247
    %s251 = sphi 0, %s250
    %s267 = sphi 0, %s251
  $region4: #{decoder_block_forward.4} parent=0 // loop_header_branch
    %20 = sbr.rel (%p18) target = $region8
  $region5: #{decoder_block_forward.4} parent=0 // loop_body
    %s22 = ssub.s32 %s17, 1
    %s23 = ssub.s32 %s17, 2
    %s30 = sadd.s32 1, %s25
    %p31 = scmp.ge.s32.totalorder %s30, 2
    %s32 = scalar_select %p31, 0, %s30
    %s33 = sadd.s32 1, %s24
    %s34 = scalar_select %p31, %s33, %s24
    %p35 = scmp.ge.s32.totalorder %s34, 2
    %s36 = scalar_select %p35, 0, %s34
    %s37 = ssub.s32 %s24, %s36
    %s38 = ssub.s32 %s25, %s32
    %s39 = sor.u32 %s37, %s38
    %p40 = scmp.eq.s32.totalorder %s39, 0
    %s42 = sadd.s32 %s41, 1
    %s43 = scalar_select %p40, %s41, %s42
    %p46 = pneg %p40
    %p47 = scmp.eq.s32.totalorder %s17, 3
    %p48 = por %p46, %p47
    %p49 = scmp.ne.s32.totalorder %s41, %s44
    %p50 = scmp.eq.s32.totalorder %s17, 0
    %p51 = por %p49, %p50
    %p52 = scmp.ne.s32.totalorder %s41, %s44
    %p53 = scmp.eq.s32.totalorder %s22, 3
    %p54 = por %p52, %p53
    %p55 = scmp.ne.s32.totalorder %s44, %s45
    %p56 = scmp.eq.s32.totalorder %s22, 0
    %p57 = por %p55, %p56
    %p58 = scmp.ne.s32.totalorder %s44, %s45
    %p59 = scmp.eq.s32.totalorder %s23, 3
    %p60 = por %p58, %p59
    %p62 = scmp.ne.s32.totalorder %s45, %s61
    %p63 = scmp.eq.s32.totalorder %s23, 0
    %p64 = por %p62, %p63
    %s65 = ssub.s32 %s24, %s36
    %p66 = scmp.eq.s32.totalorder %s65, 0
    %s68 = sadd.s32 %s67, 1
    %s69 = scalar_select %p66, %s67, %s68
    %p72 = pneg %p66
    %p73 = scmp.eq.s32.totalorder %s17, 3
    %p74 = por %p72, %p73
    %p75 = scmp.ne.s32.totalorder %s67, %s70
    %p76 = scmp.eq.s32.totalorder %s17, 0
    %p77 = por %p75, %p76
    %p78 = scmp.ne.s32.totalorder %s67, %s70
    %p79 = scmp.eq.s32.totalorder %s22, 3
    %p80 = por %p78, %p79
    %p81 = scmp.ne.s32.totalorder %s70, %s71
    %p82 = scmp.eq.s32.totalorder %s22, 0
    %p83 = por %p81, %p82
    %p84 = scmp.ne.s32.totalorder %s70, %s71
    %p85 = scmp.eq.s32.totalorder %s23, 3
    %p86 = por %p84, %p85
    %p88 = scmp.ne.s32.totalorder %s71, %s87
    %p89 = scmp.eq.s32.totalorder %s23, 0
    %p90 = por %p88, %p89
    %s92 = sadd.s32 %s91, 1
    %p95 = scmp.eq.s32.totalorder %s17, 3
    %p96 = scmp.ne.s32.totalorder %s91, %s93
    %p97 = scmp.eq.s32.totalorder %s17, 0
    %p98 = por %p96, %p97
    %p99 = scmp.ne.s32.totalorder %s91, %s93
    %p100 = scmp.eq.s32.totalorder %s22, 3
    %p101 = por %p99, %p100
    %p102 = scmp.ne.s32.totalorder %s93, %s94
    %p103 = scmp.eq.s32.totalorder %s22, 0
    %p104 = por %p102, %p103
    %p105 = scmp.ne.s32.totalorder %s93, %s94
    %p106 = scmp.eq.s32.totalorder %s23, 3
    %p107 = por %p105, %p106
    %p109 = scmp.ne.s32.totalorder %s94, %s108
    %p110 = scmp.eq.s32.totalorder %s23, 0
    %p111 = por %p109, %p110
    %s113 = sadd.s32 %s112, 1
    %p116 = scmp.eq.s32.totalorder %s17, 3
    %p117 = scmp.ne.s32.totalorder %s112, %s114
    %p118 = scmp.eq.s32.totalorder %s17, 0
    %p119 = por %p117, %p118
    %p120 = scmp.ne.s32.totalorder %s112, %s114
    %p121 = scmp.eq.s32.totalorder %s22, 3
    %p122 = por %p120, %p121
    %p123 = scmp.ne.s32.totalorder %s114, %s115
    %p124 = scmp.eq.s32.totalorder %s22, 0
    %p125 = por %p123, %p124
    %p126 = scmp.ne.s32.totalorder %s114, %s115
    %p127 = scmp.eq.s32.totalorder %s23, 3
    %p128 = por %p126, %p127
    %p130 = scmp.ne.s32.totalorder %s115, %s129
    %p131 = scmp.eq.s32.totalorder %s23, 0
    %p132 = por %p130, %p131
    %s134 = sadd.s32 %s133, 1
    %p137 = scmp.eq.s32.totalorder %s17, 3
    %p138 = scmp.ne.s32.totalorder %s133, %s135
    %p139 = scmp.eq.s32.totalorder %s17, 0
    %p140 = por %p138, %p139
    %p141 = scmp.ne.s32.totalorder %s133, %s135
    %p142 = scmp.eq.s32.totalorder %s22, 3
    %p143 = por %p141, %p142
    %p144 = scmp.ne.s32.totalorder %s135, %s136
    %p145 = scmp.eq.s32.totalorder %s22, 0
    %p146 = por %p144, %p145
    %p147 = scmp.ne.s32.totalorder %s135, %s136
    %p148 = scmp.eq.s32.totalorder %s23, 3
    %p149 = por %p147, %p148
    %p151 = scmp.ne.s32.totalorder %s136, %s150
    %p152 = scmp.eq.s32.totalorder %s23, 0
    %p153 = por %p151, %p152
    %s155 = sadd.s32 %s154, 1
    %p158 = scmp.eq.s32.totalorder %s17, 3
    %p159 = scmp.ne.s32.totalorder %s154, %s156
    %p160 = scmp.eq.s32.totalorder %s17, 0
    %p161 = por %p159, %p160
    %p162 = scmp.ne.s32.totalorder %s154, %s156
    %p163 = scmp.eq.s32.totalorder %s22, 3
    %p164 = por %p162, %p163
    %p165 = scmp.ne.s32.totalorder %s156, %s157
    %p166 = scmp.eq.s32.totalorder %s22, 0
    %p167 = por %p165, %p166
    %p168 = scmp.ne.s32.totalorder %s156, %s157
    %p169 = scmp.eq.s32.totalorder %s23, 3
    %p170 = por %p168, %p169
    %p172 = scmp.ne.s32.totalorder %s157, %s171
    %p173 = scmp.eq.s32.totalorder %s23, 0
    %p174 = por %p172, %p173
    %s176 = sadd.s32 %s175, 1
    %p179 = scmp.eq.s32.totalorder %s17, 3
    %p180 = scmp.ne.s32.totalorder %s175, %s177
    %p181 = scmp.eq.s32.totalorder %s17, 0
    %p182 = por %p180, %p181
    %p183 = scmp.ne.s32.totalorder %s175, %s177
    %p184 = scmp.eq.s32.totalorder %s22, 3
    %p185 = por %p183, %p184
    %p186 = scmp.ne.s32.totalorder %s177, %s178
    %p187 = scmp.eq.s32.totalorder %s22, 0
    %p188 = por %p186, %p187
    %p189 = scmp.ne.s32.totalorder %s177, %s178
    %p190 = scmp.eq.s32.totalorder %s23, 3
    %p191 = por %p189, %p190
    %p193 = scmp.ne.s32.totalorder %s178, %s192
    %p194 = scmp.eq.s32.totalorder %s23, 0
    %p195 = por %p193, %p194
    %s197 = sadd.s32 %s196, 1
    %p200 = scmp.eq.s32.totalorder %s17, 3
    %p201 = scmp.ne.s32.totalorder %s196, %s198
    %p202 = scmp.eq.s32.totalorder %s17, 0
    %p203 = por %p201, %p202
    %p204 = scmp.ne.s32.totalorder %s196, %s198
    %p205 = scmp.eq.s32.totalorder %s22, 3
    %p206 = por %p204, %p205
    %p207 = scmp.ne.s32.totalorder %s198, %s199
    %p208 = scmp.eq.s32.totalorder %s22, 0
    %p209 = por %p207, %p208
    %p210 = scmp.ne.s32.totalorder %s198, %s199
    %p211 = scmp.eq.s32.totalorder %s23, 3
    %p212 = por %p210, %p211
    %p214 = scmp.ne.s32.totalorder %s199, %s213
    %p215 = scmp.eq.s32.totalorder %s23, 0
    %p216 = por %p214, %p215
    %s217 = ssub.s32 %s24, %s36
    %s218 = ssub.s32 %s25, %s32
    %s219 = sor.u32 %s217, %s218
    %p220 = scmp.eq.s32.totalorder %s219, 0
    %s222 = sadd.s32 %s221, 1
    %s223 = scalar_select %p220, %s221, %s222
    %p226 = pneg %p220
    %p227 = scmp.eq.s32.totalorder %s17, 3
    %p228 = por %p226, %p227
    %p229 = scmp.ne.s32.totalorder %s221, %s224
    %p230 = scmp.eq.s32.totalorder %s17, 0
    %p231 = por %p229, %p230
    %p232 = scmp.ne.s32.totalorder %s221, %s224
    %p233 = scmp.eq.s32.totalorder %s22, 3
    %p234 = por %p232, %p233
    %p235 = scmp.ne.s32.totalorder %s224, %s225
    %p236 = scmp.eq.s32.totalorder %s22, 0
    %p237 = por %p235, %p236
    %p238 = scmp.ne.s32.totalorder %s224, %s225
    %p239 = scmp.eq.s32.totalorder %s23, 3
    %p240 = por %p238, %p239
    %p242 = scmp.ne.s32.totalorder %s225, %s241
    %p243 = scmp.eq.s32.totalorder %s23, 0
    %p244 = por %p242, %p243
    %s245 = ssub.s32 %s24, %s36
    %p246 = scmp.eq.s32.totalorder %s245, 0
    %s248 = sadd.s32 %s247, 1
    %s249 = scalar_select %p246, %s247, %s248
    %p252 = pneg %p246
    %p253 = scmp.eq.s32.totalorder %s17, 3
    %p254 = por %p252, %p253
    %p255 = scmp.ne.s32.totalorder %s247, %s250
    %p256 = scmp.eq.s32.totalorder %s17, 0
    %p257 = por %p255, %p256
    %p258 = scmp.ne.s32.totalorder %s247, %s250
    %p259 = scmp.eq.s32.totalorder %s22, 3
    %p260 = por %p258, %p259
    %p261 = scmp.ne.s32.totalorder %s250, %s251
    %p262 = scmp.eq.s32.totalorder %s22, 0
    %p263 = por %p261, %p262
    %p264 = scmp.ne.s32.totalorder %s250, %s251
    %p265 = scmp.eq.s32.totalorder %s23, 3
    %p266 = por %p264, %p265
    %p268 = scmp.ne.s32.totalorder %s251, %s267
    %p269 = scmp.eq.s32.totalorder %s23, 0
    %p270 = por %p268, %p269
    %p271 = scmp.le.s32.totalorder 1, %s17
    %p272 = scmp.lt.s32.totalorder %s17, 5
    %p273 = pnand %p271, %p272
    %p274 = pneg %p273
    // Predicated region
    $region9: #{decoder_block_forward.4} parent=5 // pred_check
      _
    $region10: #{decoder_block_forward.4} parent=5 // pred_check_branch
      %276 = sbr.rel (%p273) target = $region12
    $region11: #{decoder_block_forward.4} parent=5 // pred_region
      %s277 = ssub.s32 %s17, 1
      // Predicated region
      $region13: #{decoder_block_forward.4} parent=11 // pred_check
        %p278 = pneg %p104
      $region14: #{decoder_block_forward.4} parent=11 // pred_check_branch
        %280 = sbr.rel (%p278) target = $region16
      $region15: #{decoder_block_forward.4} parent=11 // pred_region
        _
      $region16: #{decoder_block_forward.4} parent=11 // pred_fallthru
        _
      // Predicated region
      $region17: #{decoder_block_forward.4} parent=11 // pred_check
        %p281 = pneg %p125
      $region18: #{decoder_block_forward.4} parent=11 // pred_check_branch
        %283 = sbr.rel (%p281) target = $region20
      $region19: #{decoder_block_forward.4} parent=11 // pred_region
        _
      $region20: #{decoder_block_forward.4} parent=11 // pred_fallthru
        _
      // Predicated region
      $region21: #{decoder_block_forward.4} parent=11 // pred_check
        %p284 = pneg %p146
      $region22: #{decoder_block_forward.4} parent=11 // pred_check_branch
        %286 = sbr.rel (%p284) target = $region24
      $region23: #{decoder_block_forward.4} parent=11 // pred_region
        _
      $region24: #{decoder_block_forward.4} parent=11 // pred_fallthru
        _
      // Predicated region
      $region25: #{decoder_block_forward.4} parent=11 // pred_check
        %p287 = pneg %p167
      $region26: #{decoder_block_forward.4} parent=11 // pred_check_branch
        %289 = sbr.rel (%p287) target = $region28
      $region27: #{decoder_block_forward.4} parent=11 // pred_region
        _
      $region28: #{decoder_block_forward.4} parent=11 // pred_fallthru
        _
      // Predicated region
      $region29: #{decoder_block_forward.4} parent=11 // pred_check
        %p290 = pneg %p188
      $region30: #{decoder_block_forward.4} parent=11 // pred_check_branch
        %292 = sbr.rel (%p290) target = $region32
      $region31: #{decoder_block_forward.4} parent=11 // pred_region
        _
      $region32: #{decoder_block_forward.4} parent=11 // pred_fallthru
        _
      // Predicated region
      $region33: #{decoder_block_forward.4} parent=11 // pred_check
        %p293 = pneg %p209
      $region34: #{decoder_block_forward.4} parent=11 // pred_check_branch
        %295 = sbr.rel (%p293) target = $region36
      $region35: #{decoder_block_forward.4} parent=11 // pred_region
        _
      $region36: #{decoder_block_forward.4} parent=11 // pred_fallthru
        _
    $region12: #{decoder_block_forward.4} parent=5 // pred_fallthru
      _
    %p296 = scmp.lt.s32.totalorder %s17, 4
    // Predicated region
    $region37: #{decoder_block_forward.4} parent=5 // pred_check
      %p297 = pneg %p296
    $region38: #{decoder_block_forward.4} parent=5 // pred_check_branch
      %299 = sbr.rel (%p297) target = $region40
    $region39: #{decoder_block_forward.4} parent=5 // pred_region
      // Predicated region
      $region41: #{decoder_block_forward.4} parent=39 // pred_check
        %p300 = pneg %p51
      $region42: #{decoder_block_forward.4} parent=39 // pred_check_branch
        %302 = sbr.rel (%p300) target = $region44
      $region43: #{decoder_block_forward.4} parent=39 // pred_region
        %s303 = smul.u32 16, %s25
        %p304 = scmp.lt.s32.totalorder %s24, 1
        %s305 = scalar_select %p304, %s24, 1
        %p306 = scmp.lt.s32.totalorder %s303, 31
        %s307 = scalar_select %p306, %s303, 31
        %s308 = smul.addr %s305, 32
        %s309 = sadd.s32 %s307, %s308
        %s310 = smul.addr %s309, 8
        %s311 = scalar_lea.vmem %s0, %s310
        %s312 = smul.u32 16, %s25
      $region44: #{decoder_block_forward.4} parent=39 // pred_fallthru
        _
      // Predicated region
      $region45: #{decoder_block_forward.4} parent=39 // pred_check
        %p313 = pneg %p77
      $region46: #{decoder_block_forward.4} parent=39 // pred_check_branch
        %315 = sbr.rel (%p313) target = $region48
      $region47: #{decoder_block_forward.4} parent=39 // pred_region
        %p316 = scmp.lt.s32.totalorder %s24, 1
        %s317 = scalar_select %p316, %s24, 1
        %s318 = scalar_lea.vmem %s1, %s317
      $region48: #{decoder_block_forward.4} parent=39 // pred_fallthru
        _
    $region40: #{decoder_block_forward.4} parent=5 // pred_fallthru
      _
    %p319 = scmp.le.s32.totalorder 1, %s17
    %p320 = scmp.lt.s32.totalorder %s17, 5
    %p321 = pnand %p319, %p320
    %p322 = pneg %p321
    // Predicated region
    $region49: #{decoder_block_forward.4} parent=5 // pred_check
      _
    $region50: #{decoder_block_forward.4} parent=5 // pred_check_branch
      %324 = sbr.rel (%p321) target = $region52
    $region51: #{decoder_block_forward.4} parent=5 // pred_region
      %s325 = ssub.s32 %s17, 1
      %s326 = smul.u32 16, %s27
      %p327 = scmp.lt.s32.totalorder %s26, 1
      %s328 = scalar_select %p327, %s26, 1
      %p329 = scmp.lt.s32.totalorder %s326, 31
      %s330 = scalar_select %p329, %s326, 31
      %s331 = smul.addr %s328, 32
      %s332 = sadd.s32 %s330, %s331
      %s333 = smul.addr %s332, 8
      %s334 = scalar_lea.vmem %s0, %s333
      %p335 = pneg %p57
      %p336 = pneg %p54
      %p337 = scmp.lt.s32.totalorder %s26, 1
      %s338 = scalar_select %p337, %s26, 1
      %s339 = scalar_lea.vmem %s1, %s338
      %p340 = pneg %p83
      %p341 = pneg %p80
      %p342 = pneg %p104
      %p343 = pneg %p101
      %p344 = pneg %p125
      %p345 = pneg %p122
      %p346 = pneg %p146
      %p347 = pneg %p143
      %p348 = pneg %p167
      %p349 = pneg %p164
      %p350 = pneg %p188
      %p351 = pneg %p185
      %p352 = pneg %p209
      %p353 = pneg %p206
      %p354 = pneg %p237
      %p355 = pneg %p234
      %s356 = smul.u32 16, %s27
      %p357 = scmp.lt.s32.totalorder %s26, 1
      %s358 = scalar_select %p357, %s26, 1
      %p359 = scmp.lt.s32.totalorder %s356, 31
      %s360 = scalar_select %p359, %s356, 31
      %s361 = smul.addr %s358, 32
      %s362 = sadd.s32 %s360, %s361
      %s363 = smul.addr %s362, 8
      %s364 = scalar_lea.vmem %s8, %s363
      %p365 = pneg %p263
      %p366 = pneg %p260
      %p367 = scmp.lt.s32.totalorder %s26, 1
      %s368 = scalar_select %p367, %s26, 1
      %s369 = smul.addr %s368, 2
      %s370 = scalar_lea.vmem %s9, %s369
      %s371 = smul.u32 16, %s27
      %p372 = scmp.lt.s32.totalorder %s26, 1
      %s373 = scalar_select %p372, %s26, 1
      %p374 = scmp.lt.s32.totalorder %s371, 31
      %s375 = scalar_select %p374, %s371, 31
      %s376 = smul.addr %s373, 32
      %s377 = sadd.s32 %s375, %s376
      %s378 = smul.addr %s377, 8
      %s379 = scalar_lea.vmem %s0, %s378
      %s380 = smul.u32 16, %s27
      %p381 = scmp.lt.s32.totalorder %s26, 1
      %s382 = scalar_select %p381, %s26, 1
      %s383 = scalar_lea.vmem %s1, %s382
      %s384 = smul.u32 16, %s27
      %p385 = scmp.lt.s32.totalorder %s26, 1
      %s386 = scalar_select %p385, %s26, 1
      %p387 = scmp.lt.s32.totalorder %s384, 31
      %s388 = scalar_select %p387, %s384, 31
      %s389 = smul.addr %s386, 32
      %s390 = sadd.s32 %s388, %s389
      %s391 = smul.addr %s390, 8
      %s392 = scalar_lea.vmem %s8, %s391
      %s393 = smul.u32 16, %s27
      %p394 = scmp.lt.s32.totalorder %s26, 1
      %s395 = scalar_select %p394, %s26, 1
      %s396 = smul.addr %s395, 2
      %s397 = scalar_lea.vmem %s9, %s396
      %v398 = vld [vmem:[%s379] sm:$0xff]
      %v399 = vld [vmem:[%s379 + $0x8] sm:$0xff]
      %v400 = vld [vmem:[%s379 + $0x10] sm:$0xff]
      %v401 = vld [vmem:[%s379 + $0x18] sm:$0xff]
      %v402 = vld [vmem:[%s379 + $0x20] sm:$0xff]
      %v403 = vld [vmem:[%s379 + $0x28] sm:$0xff]
      %v404 = vld [vmem:[%s379 + $0x30] sm:$0xff]
      %v405 = vld [vmem:[%s379 + $0x38] sm:$0xff]
      %v406 = vld [vmem:[%s379 + $0x40] sm:$0xff]
      %v407 = vld [vmem:[%s379 + $0x48] sm:$0xff]
      %v408 = vld [vmem:[%s379 + $0x50] sm:$0xff]
      %v409 = vld [vmem:[%s379 + $0x58] sm:$0xff]
      %v410 = vld [vmem:[%s379 + $0x60] sm:$0xff]
      %v411 = vld [vmem:[%s379 + $0x68] sm:$0xff]
      %v412 = vld [vmem:[%s379 + $0x70] sm:$0xff]
      %v413 = vld [vmem:[%s379 + $0x78] sm:$0xff]
      %v414 = vld [vmem:[%s383] sm:$0x1]
      %v415 = vmul.f32 %v414, 0.00390625
      %v416 = vld [vmem:[%s2] sm:$0xff]
      %v417 = vld [vmem:[%s2 + $0x8] sm:$0xff]
      %v418 = vld [vmem:[%s2 + $0x10] sm:$0xff]
      %v419 = vld [vmem:[%s2 + $0x18] sm:$0xff]
      %v420 = vld [vmem:[%s2 + $0x20] sm:$0xff]
      %v421 = vld [vmem:[%s2 + $0x28] sm:$0xff]
      %v422 = vld [vmem:[%s2 + $0x30] sm:$0xff]
      %v423 = vld [vmem:[%s2 + $0x38] sm:$0xff]
      %v424 = vld [vmem:[%s2 + $0x40] sm:$0xff]
      %v425 = vld [vmem:[%s2 + $0x48] sm:$0xff]
      %v426 = vld [vmem:[%s2 + $0x50] sm:$0xff]
      %v427 = vld [vmem:[%s2 + $0x58] sm:$0xff]
      %v428 = vld [vmem:[%s2 + $0x60] sm:$0xff]
      %v429 = vld [vmem:[%s2 + $0x68] sm:$0xff]
      %v430 = vld [vmem:[%s2 + $0x70] sm:$0xff]
      %v431 = vld [vmem:[%s2 + $0x78] sm:$0xff]
      %v432 = vld [vmem:[%s3] sm:$0x1]
      %433 = vmatprep.subr.mxu0 0.0
      %434 = vmatpush1.msra.mxu0 %v431
      %435 = vmatprep.subr.mxu0 0.0
      %436 = vmatpush1.msra.mxu0 %v430
      %437 = vmatprep.subr.mxu0 0.0
      %438 = vmatpush1.msra.mxu0 %v429
      %439 = vmatprep.subr.mxu0 0.0
      %440 = vmatpush1.msra.mxu0 %v428
      %441 = vmatprep.subr.mxu0 0.0
      %442 = vmatpush1.msra.mxu0 %v427
      %443 = vmatprep.subr.mxu0 0.0
      %444 = vmatpush1.msra.mxu0 %v426
      %445 = vmatprep.subr.mxu0 0.0
      %446 = vmatpush1.msra.mxu0 %v425
      %447 = vmatprep.subr.mxu0 0.0
      %448 = vmatpush1.msra.mxu0 %v424
      %449 = vmatprep.subr.mxu0 0.0
      %450 = vmatpush1.msra.mxu0 %v423
      %451 = vmatprep.subr.mxu0 0.0
      %452 = vmatpush1.msra.mxu0 %v422
      %453 = vmatprep.subr.mxu0 0.0
      %454 = vmatpush1.msra.mxu0 %v421
      %455 = vmatprep.subr.mxu0 0.0
      %456 = vmatpush1.msra.mxu0 %v420
      %457 = vmatprep.subr.mxu0 0.0
      %458 = vmatpush1.msra.mxu0 %v419
      %459 = vmatprep.subr.mxu0 0.0
      %460 = vmatpush1.msra.mxu0 %v418
      %461 = vmatprep.subr.mxu0 0.0
      %462 = vmatpush1.msra.mxu0 %v417
      %463 = vmatprep.subr.mxu0 0.0
      %464 = vmatpush1.msra.mxu0 %v416
      %465 = vmatprep.subr.mxu0 0.0
      %466 = vmatpush2.msra.mxu0 0.0
      %467 = vmatprep.subr.mxu0 0.0
      %468 = vmatpush2.msra.mxu0 0.0
      %469 = vmatprep.subr.mxu0 0.0
      %470 = vmatpush2.msra.mxu0 0.0
      %471 = vmatprep.subr.mxu0 0.0
      %472 = vmatpush2.msra.mxu0 0.0
      %473 = vmatprep.subr.mxu0 0.0
      %474 = vmatpush2.msra.mxu0 0.0
      %475 = vmatprep.subr.mxu0 0.0
      %476 = vmatpush2.msra.mxu0 0.0
      %477 = vmatprep.subr.mxu0 0.0
      %478 = vmatpush2.msra.mxu0 0.0
      %479 = vmatprep.subr.mxu0 0.0
      %480 = vmatpush2.msra.mxu0 0.0
      %481 = vmatprep.subr.mxu0 0.0
      %482 = vmatpush2.msra.mxu0 0.0
      %483 = vmatprep.subr.mxu0 0.0
      %484 = vmatpush2.msra.mxu0 0.0
      %485 = vmatprep.subr.mxu0 0.0
      %486 = vmatpush2.msra.mxu0 0.0
      %487 = vmatprep.subr.mxu0 0.0
      %488 = vmatpush2.msra.mxu0 0.0
      %489 = vmatprep.subr.mxu0 0.0
      %490 = vmatpush2.msra.mxu0 0.0
      %491 = vmatprep.subr.mxu0 0.0
      %492 = vmatpush2.msra.mxu0 0.0
      %493 = vmatprep.subr.mxu0 0.0
      %494 = vmatpush2.msra.mxu0 0.0
      %495 = vmatprep.subr.mxu0 0.0
      %496 = vmatpush2.msra.mxu0 0.0
      %497 = vmatprep.mubr.f32.mxu0 0.0
      %498 = vmatmul.mubr.f32.gmra.mxu0 %v415
      %v499 = vpop.f32.mrf.mxu0
      %v500 = vadd.f32 %v432, %v499
      %v501 = vpop.f32.mrf.mxu0
      %502 = vdwg.mxu0
      %v503 = vmax.f32 %v500, 0.0
      %v504 = vld [vmem:[%s4] sm:$0xff]
      %v505 = vld [vmem:[%s4 + $0x8] sm:$0xff]
      %v506 = vld [vmem:[%s4 + $0x10] sm:$0xff]
      %v507 = vld [vmem:[%s4 + $0x18] sm:$0xff]
      %v508 = vld [vmem:[%s4 + $0x20] sm:$0xff]
      %v509 = vld [vmem:[%s4 + $0x28] sm:$0xff]
      %v510 = vld [vmem:[%s4 + $0x30] sm:$0xff]
      %v511 = vld [vmem:[%s4 + $0x38] sm:$0xff]
      %v512 = vld [vmem:[%s4 + $0x40] sm:$0xff]
      %v513 = vld [vmem:[%s4 + $0x48] sm:$0xff]
      %v514 = vld [vmem:[%s4 + $0x50] sm:$0xff]
      %v515 = vld [vmem:[%s4 + $0x58] sm:$0xff]
      %v516 = vld [vmem:[%s4 + $0x60] sm:$0xff]
      %v517 = vld [vmem:[%s4 + $0x68] sm:$0xff]
      %v518 = vld [vmem:[%s4 + $0x70] sm:$0xff]
      %v519 = vld [vmem:[%s4 + $0x78] sm:$0xff]
      %v520 = vld [vmem:[%s5] sm:$0x1]
      %521 = vmatprep.subr.mxu0 0.0
      %522 = vmatpush1.msra.mxu0 %v519
      %523 = vmatprep.subr.mxu0 0.0
      %524 = vmatpush1.msra.mxu0 %v518
      %525 = vmatprep.subr.mxu0 0.0
      %526 = vmatpush1.msra.mxu0 %v517
      %527 = vmatprep.subr.mxu0 0.0
      %528 = vmatpush1.msra.mxu0 %v516
      %529 = vmatprep.subr.mxu0 0.0
      %530 = vmatpush1.msra.mxu0 %v515
      %531 = vmatprep.subr.mxu0 0.0
      %532 = vmatpush1.msra.mxu0 %v514
      %533 = vmatprep.subr.mxu0 0.0
      %534 = vmatpush1.msra.mxu0 %v513
      %535 = vmatprep.subr.mxu0 0.0
      %536 = vmatpush1.msra.mxu0 %v512
      %537 = vmatprep.subr.mxu0 0.0
      %538 = vmatpush1.msra.mxu0 %v511
      %539 = vmatprep.subr.mxu0 0.0
      %540 = vmatpush1.msra.mxu0 %v510
      %541 = vmatprep.subr.mxu0 0.0
      %542 = vmatpush1.msra.mxu0 %v509
      %543 = vmatprep.subr.mxu0 0.0
      %544 = vmatpush1.msra.mxu0 %v508
      %545 = vmatprep.subr.mxu0 0.0
      %546 = vmatpush1.msra.mxu0 %v507
      %547 = vmatprep.subr.mxu0 0.0
      %548 = vmatpush1.msra.mxu0 %v506
      %549 = vmatprep.subr.mxu0 0.0
      %550 = vmatpush1.msra.mxu0 %v505
      %551 = vmatprep.subr.mxu0 0.0
      %552 = vmatpush1.msra.mxu0 %v504
      %553 = vmatprep.subr.mxu0 0.0
      %554 = vmatpush2.msra.mxu0 0.0
      %555 = vmatprep.subr.mxu0 0.0
      %556 = vmatpush2.msra.mxu0 0.0
      %557 = vmatprep.subr.mxu0 0.0
      %558 = vmatpush2.msra.mxu0 0.0
      %559 = vmatprep.subr.mxu0 0.0
      %560 = vmatpush2.msra.mxu0 0.0
      %561 = vmatprep.subr.mxu0 0.0
      %562 = vmatpush2.msra.mxu0 0.0
      %563 = vmatprep.subr.mxu0 0.0
      %564 = vmatpush2.msra.mxu0 0.0
      %565 = vmatprep.subr.mxu0 0.0
      %566 = vmatpush2.msra.mxu0 0.0
      %567 = vmatprep.subr.mxu0 0.0
      %568 = vmatpush2.msra.mxu0 0.0
      %569 = vmatprep.subr.mxu0 0.0
      %570 = vmatpush2.msra.mxu0 0.0
      %571 = vmatprep.subr.mxu0 0.0
      %572 = vmatpush2.msra.mxu0 0.0
      %573 = vmatprep.subr.mxu0 0.0
      %574 = vmatpush2.msra.mxu0 0.0
      %575 = vmatprep.subr.mxu0 0.0
      %576 = vmatpush2.msra.mxu0 0.0
      %577 = vmatprep.subr.mxu0 0.0
      %578 = vmatpush2.msra.mxu0 0.0
      %579 = vmatprep.subr.mxu0 0.0
      %580 = vmatpush2.msra.mxu0 0.0
      %581 = vmatprep.subr.mxu0 0.0
      %582 = vmatpush2.msra.mxu0 0.0
      %583 = vmatprep.subr.mxu0 0.0
      %584 = vmatpush2.msra.mxu0 0.0
      %585 = vmatprep.mubr.f32.mxu0 0.0
      %586 = vmatmul.mubr.f32.gmra.mxu0 %v503
      %v587 = vpop.f32.mrf.mxu0
      %v588 = vadd.f32 %v520, %v587
      %v589 = vpop.f32.mrf.mxu0
      %590 = vdwg.mxu0
      %v591 = vsub.f32 0.0, %v588
      %v592 = vmul.f32 %v591, 1.442695
      %v593 = vpow.pop %v592
      %v594 = vadd.f32 %v593, 1.0
      %v595 = vrcp.pop %v594
      %v596 = vmul.f32 1.0, %v595
      %v597 = vld [vmem:[%s6] sm:$0x1]
      %v599 = vlaneseq
      %v600 = vshrl.u32 %v599, 7
      %v601 = vsub.s32 0, %v600
      %v602 = vrot.slane %v597, %v601
      %v604 = vmul.f32 %v398, %v602
      %v605 = vmul.f32 %v399, %v602
      %v606 = vmul.f32 %v400, %v602
      %v607 = vmul.f32 %v401, %v602
      %v608 = vmul.f32 %v402, %v602
      %v609 = vmul.f32 %v403, %v602
      %v610 = vmul.f32 %v404, %v602
      %v611 = vmul.f32 %v405, %v602
      %v612 = vmul.f32 %v406, %v602
      %v613 = vmul.f32 %v407, %v602
      %v614 = vmul.f32 %v408, %v602
      %v615 = vmul.f32 %v409, %v602
      %v616 = vmul.f32 %v410, %v602
      %v617 = vmul.f32 %v411, %v602
      %v618 = vmul.f32 %v412, %v602
      %v619 = vmul.f32 %v413, %v602
      %620 = vadd.xlane.f32.xlu0 %v604
      %v621 = vpop.xlane.xlu0 %620
      %622 = vadd.xlane.f32.xlu0 %v605
      %v623 = vpop.xlane.xlu0 %622
      %624 = vadd.xlane.f32.xlu0 %v606
      %v625 = vpop.xlane.xlu0 %624
      %626 = vadd.xlane.f32.xlu0 %v607
      %v627 = vpop.xlane.xlu0 %626
      %628 = vadd.xlane.f32.xlu0 %v608
      %v629 = vpop.xlane.xlu0 %628
      %630 = vadd.xlane.f32.xlu0 %v609
      %v631 = vpop.xlane.xlu0 %630
      %632 = vadd.xlane.f32.xlu0 %v610
      %v633 = vpop.xlane.xlu0 %632
      %634 = vadd.xlane.f32.xlu0 %v611
      %v635 = vpop.xlane.xlu0 %634
      %636 = vadd.xlane.f32.xlu0 %v612
      %v637 = vpop.xlane.xlu0 %636
      %638 = vadd.xlane.f32.xlu0 %v613
      %v639 = vpop.xlane.xlu0 %638
      %640 = vadd.xlane.f32.xlu0 %v614
      %v641 = vpop.xlane.xlu0 %640
      %642 = vadd.xlane.f32.xlu0 %v615
      %v643 = vpop.xlane.xlu0 %642
      %644 = vadd.xlane.f32.xlu0 %v616
      %v645 = vpop.xlane.xlu0 %644
      %646 = vadd.xlane.f32.xlu0 %v617
      %v647 = vpop.xlane.xlu0 %646
      %648 = vadd.xlane.f32.xlu0 %v618
      %v649 = vpop.xlane.xlu0 %648
      %650 = vadd.xlane.f32.xlu0 %v619
      %v651 = vpop.xlane.xlu0 %650
      %s652 = sld [smem:[#allocation2]]
      %v653 = vstv %s652
      %v654 = vadd.f32 %v621, %v653
      %v655 = vadd.f32 %v623, %v653
      %v656 = vadd.f32 %v625, %v653
      %v657 = vadd.f32 %v627, %v653
      %v658 = vadd.f32 %v629, %v653
      %v659 = vadd.f32 %v631, %v653
      %v660 = vadd.f32 %v633, %v653
      %v661 = vadd.f32 %v635, %v653
      %v662 = vadd.f32 %v637, %v653
      %v663 = vadd.f32 %v639, %v653
      %v664 = vadd.f32 %v641, %v653
      %v665 = vadd.f32 %v643, %v653
      %v666 = vadd.f32 %v645, %v653
      %v667 = vadd.f32 %v647, %v653
      %v668 = vadd.f32 %v649, %v653
      %v669 = vadd.f32 %v651, %v653
      %v670 = vsub.f32 0.0, %v654
      %v671 = vsub.f32 0.0, %v655
      %v672 = vsub.f32 0.0, %v656
      %v673 = vsub.f32 0.0, %v657
      %v674 = vsub.f32 0.0, %v658
      %v675 = vsub.f32 0.0, %v659
      %v676 = vsub.f32 0.0, %v660
      %v677 = vsub.f32 0.0, %v661
      %v678 = vsub.f32 0.0, %v662
      %v679 = vsub.f32 0.0, %v663
      %v680 = vsub.f32 0.0, %v664
      %v681 = vsub.f32 0.0, %v665
      %v682 = vsub.f32 0.0, %v666
      %v683 = vsub.f32 0.0, %v667
      %v684 = vsub.f32 0.0, %v668
      %v685 = vsub.f32 0.0, %v669
      %v686 = vmul.f32 %v670, 1.442695
      %v687 = vpow.pop %v686
      %v688 = vmul.f32 %v671, 1.442695
      %v689 = vpow.pop %v688
      %v690 = vmul.f32 %v672, 1.442695
      %v691 = vpow.pop %v690
      %v692 = vmul.f32 %v673, 1.442695
      %v693 = vpow.pop %v692
      %v694 = vmul.f32 %v674, 1.442695
      %v695 = vpow.pop %v694
      %v696 = vmul.f32 %v675, 1.442695
      %v697 = vpow.pop %v696
      %v698 = vmul.f32 %v676, 1.442695
      %v699 = vpow.pop %v698
      %v700 = vmul.f32 %v677, 1.442695
      %v701 = vpow.pop %v700
      %v702 = vmul.f32 %v678, 1.442695
      %v703 = vpow.pop %v702
      %v704 = vmul.f32 %v679, 1.442695
      %v705 = vpow.pop %v704
      %v706 = vmul.f32 %v680, 1.442695
      %v707 = vpow.pop %v706
      %v708 = vmul.f32 %v681, 1.442695
      %v709 = vpow.pop %v708
      %v710 = vmul.f32 %v682, 1.442695
      %v711 = vpow.pop %v710
      %v712 = vmul.f32 %v683, 1.442695
      %v713 = vpow.pop %v712
      %v714 = vmul.f32 %v684, 1.442695
      %v715 = vpow.pop %v714
      %v716 = vmul.f32 %v685, 1.442695
      %v717 = vpow.pop %v716
      %v718 = vadd.f32 %v687, 1.0
      %v719 = vadd.f32 %v689, 1.0
      %v720 = vadd.f32 %v691, 1.0
      %v721 = vadd.f32 %v693, 1.0
      %v722 = vadd.f32 %v695, 1.0
      %v723 = vadd.f32 %v697, 1.0
      %v724 = vadd.f32 %v699, 1.0
      %v725 = vadd.f32 %v701, 1.0
      %v726 = vadd.f32 %v703, 1.0
      %v727 = vadd.f32 %v705, 1.0
      %v728 = vadd.f32 %v707, 1.0
      %v729 = vadd.f32 %v709, 1.0
      %v730 = vadd.f32 %v711, 1.0
      %v731 = vadd.f32 %v713, 1.0
      %v732 = vadd.f32 %v715, 1.0
      %v733 = vadd.f32 %v717, 1.0
      %v734 = vrcp.pop %v718
      %v735 = vmul.f32 1.0, %v734
      %v736 = vrcp.pop %v719
      %v737 = vmul.f32 1.0, %v736
      %v738 = vrcp.pop %v720
      %v739 = vmul.f32 1.0, %v738
      %v740 = vrcp.pop %v721
      %v741 = vmul.f32 1.0, %v740
      %v742 = vrcp.pop %v722
      %v743 = vmul.f32 1.0, %v742
      %v744 = vrcp.pop %v723
      %v745 = vmul.f32 1.0, %v744
      %v746 = vrcp.pop %v724
      %v747 = vmul.f32 1.0, %v746
      %v748 = vrcp.pop %v725
      %v749 = vmul.f32 1.0, %v748
      %v750 = vrcp.pop %v726
      %v751 = vmul.f32 1.0, %v750
      %v752 = vrcp.pop %v727
      %v753 = vmul.f32 1.0, %v752
      %v754 = vrcp.pop %v728
      %v755 = vmul.f32 1.0, %v754
      %v756 = vrcp.pop %v729
      %v757 = vmul.f32 1.0, %v756
      %v758 = vrcp.pop %v730
      %v759 = vmul.f32 1.0, %v758
      %v760 = vrcp.pop %v731
      %v761 = vmul.f32 1.0, %v760
      %v762 = vrcp.pop %v732
      %v763 = vmul.f32 1.0, %v762
      %v764 = vrcp.pop %v733
      %v765 = vmul.f32 1.0, %v764
      %v766 = vlaneseq
      %v767 = vshrl.u32 %v766, 7
      %v768 = vsub.s32 0, %v767
      %v769 = vrot.slane %v596, %v768
      %v770 = vadd.f32 %v769, %v735
      %v771 = vadd.f32 %v769, %v737
      %v772 = vadd.f32 %v769, %v739
      %v773 = vadd.f32 %v769, %v741
      %v774 = vadd.f32 %v769, %v743
      %v775 = vadd.f32 %v769, %v745
      %v776 = vadd.f32 %v769, %v747
      %v777 = vadd.f32 %v769, %v749
      %v778 = vadd.f32 %v769, %v751
      %v779 = vadd.f32 %v769, %v753
      %v780 = vadd.f32 %v769, %v755
      %v781 = vadd.f32 %v769, %v757
      %v782 = vadd.f32 %v769, %v759
      %v783 = vadd.f32 %v769, %v761
      %v784 = vadd.f32 %v769, %v763
      %v785 = vadd.f32 %v769, %v765
      %v786 = vmul.f32 %v398, %v770
      %v787 = vmul.f32 %v399, %v771
      %v788 = vmul.f32 %v400, %v772
      %v789 = vmul.f32 %v401, %v773
      %v790 = vmul.f32 %v402, %v774
      %v791 = vmul.f32 %v403, %v775
      %v792 = vmul.f32 %v404, %v776
      %v793 = vmul.f32 %v405, %v777
      %v794 = vmul.f32 %v406, %v778
      %v795 = vmul.f32 %v407, %v779
      %v796 = vmul.f32 %v408, %v780
      %v797 = vmul.f32 %v409, %v781
      %v798 = vmul.f32 %v410, %v782
      %v799 = vmul.f32 %v411, %v783
      %v800 = vmul.f32 %v412, %v784
      %v801 = vmul.f32 %v413, %v785
      %802 = vst [vmem:[%s392] sm:$0xff] %v786
      %803 = vst [vmem:[%s392 + $0x8] sm:$0xff] %v787
      %804 = vst [vmem:[%s392 + $0x10] sm:$0xff] %v788
      %805 = vst [vmem:[%s392 + $0x18] sm:$0xff] %v789
      %806 = vst [vmem:[%s392 + $0x20] sm:$0xff] %v790
      %807 = vst [vmem:[%s392 + $0x28] sm:$0xff] %v791
      %808 = vst [vmem:[%s392 + $0x30] sm:$0xff] %v792
      %809 = vst [vmem:[%s392 + $0x38] sm:$0xff] %v793
      %810 = vst [vmem:[%s392 + $0x40] sm:$0xff] %v794
      %811 = vst [vmem:[%s392 + $0x48] sm:$0xff] %v795
      %812 = vst [vmem:[%s392 + $0x50] sm:$0xff] %v796
      %813 = vst [vmem:[%s392 + $0x58] sm:$0xff] %v797
      %814 = vst [vmem:[%s392 + $0x60] sm:$0xff] %v798
      %815 = vst [vmem:[%s392 + $0x68] sm:$0xff] %v799
      %816 = vst [vmem:[%s392 + $0x70] sm:$0xff] %v800
      %817 = vst [vmem:[%s392 + $0x78] sm:$0xff] %v801
      %p818 = scmp.eq.s32.totalorder %s27, 0
      // Predicated region
      $region53: #{decoder_block_forward.4} parent=51 // pred_check
        %p819 = pneg %p818
      $region54: #{decoder_block_forward.4} parent=51 // pred_check_branch
        %821 = sbr.rel (%p819) target = $region56
      $region55: #{decoder_block_forward.4} parent=51 // pred_region
        %822 = vst [vmem:[%s397] sm:$0x3] 0.0
      $region56: #{decoder_block_forward.4} parent=51 // pred_fallthru
        _
      %v823 = vld [vmem:[%s397] sm:$0x3]
      %v824 = vadd.f32 %v786, %v787
      %v825 = vadd.f32 %v824, %v788
      %v826 = vadd.f32 %v825, %v789
      %v827 = vadd.f32 %v826, %v790
      %v828 = vadd.f32 %v827, %v791
      %v829 = vadd.f32 %v828, %v792
      %v830 = vadd.f32 %v829, %v793
      %v831 = vadd.f32 %v830, %v794
      %v832 = vadd.f32 %v831, %v795
      %v833 = vadd.f32 %v832, %v796
      %v834 = vadd.f32 %v833, %v797
      %v835 = vadd.f32 %v834, %v798
      %v836 = vadd.f32 %v835, %v799
      %v837 = vadd.f32 %v836, %v800
      %v838 = vadd.f32 %v837, %v801
      %v839 = vrot.slane %v838, 4
      %v840 = vadd.f32 %v838, %v839
      %v841 = vrot.slane %v840, 2
      %v842 = vadd.f32 %v840, %v841
      %v843 = vrot.slane %v842, 1
      %v844 = vadd.f32 %v842, %v843
      %v845 = vmul.f32 %v786, %v786
      %v846 = vmul.f32 %v787, %v787
      %v847 = vmul.f32 %v788, %v788
      %v848 = vmul.f32 %v789, %v789
      %v849 = vmul.f32 %v790, %v790
      %v850 = vmul.f32 %v791, %v791
      %v851 = vmul.f32 %v792, %v792
      %v852 = vmul.f32 %v793, %v793
      %v853 = vmul.f32 %v794, %v794
      %v854 = vmul.f32 %v795, %v795
      %v855 = vmul.f32 %v796, %v796
      %v856 = vmul.f32 %v797, %v797
      %v857 = vmul.f32 %v798, %v798
      %v858 = vmul.f32 %v799, %v799
      %v859 = vmul.f32 %v800, %v800
      %v860 = vmul.f32 %v801, %v801
      %v861 = vadd.f32 %v845, %v846
      %v862 = vadd.f32 %v861, %v847
      %v863 = vadd.f32 %v862, %v848
      %v864 = vadd.f32 %v863, %v849
      %v865 = vadd.f32 %v864, %v850
      %v866 = vadd.f32 %v865, %v851
      %v867 = vadd.f32 %v866, %v852
      %v868 = vadd.f32 %v867, %v853
      %v869 = vadd.f32 %v868, %v854
      %v870 = vadd.f32 %v869, %v855
      %v871 = vadd.f32 %v870, %v856
      %v872 = vadd.f32 %v871, %v857
      %v873 = vadd.f32 %v872, %v858
      %v874 = vadd.f32 %v873, %v859
      %v875 = vadd.f32 %v874, %v860
      %v876 = vrot.slane %v875, 4
      %v877 = vadd.f32 %v875, %v876
      %v878 = vrot.slane %v877, 2
      %v879 = vadd.f32 %v877, %v878
      %v880 = vrot.slane %v879, 1
      %v881 = vadd.f32 %v879, %v880
      %vm882 = vcmask 1040384
      %v883 = vsel %vm882, %v844, %v881
      %v884 = vadd.f32 %v823, %v883
      %885 = vst [vmem:[%s397] sm:$0x3] %v884
      %s886 = smul.u32 16, %s27
      %p887 = scmp.lt.s32.totalorder %s26, 1
      %s888 = scalar_select %p887, %s26, 1
      %p889 = scmp.lt.s32.totalorder %s886, 31
      %s890 = scalar_select %p889, %s886, 31
      %s891 = smul.addr %s888, 32
      %s892 = sadd.s32 %s890, %s891
      %s893 = smul.addr %s892, 8
      %s894 = scalar_lea.vmem %s8, %s893
      %p895 = scmp.lt.s32.totalorder %s26, 1
      %s896 = scalar_select %p895, %s26, 1
      %s897 = smul.addr %s896, 2
      %s898 = scalar_lea.vmem %s9, %s897
      // Predicated region
      $region57: #{decoder_block_forward.4} parent=51 // pred_check
        %p899 = pneg %p234
      $region58: #{decoder_block_forward.4} parent=51 // pred_check_branch
        %901 = sbr.rel (%p899) target = $region60
      $region59: #{decoder_block_forward.4} parent=51 // pred_region
        %s902 = smul.u32 16, %s27
      $region60: #{decoder_block_forward.4} parent=51 // pred_fallthru
        _
      // Predicated region
      $region61: #{decoder_block_forward.4} parent=51 // pred_check
        %p903 = pneg %p260
      $region62: #{decoder_block_forward.4} parent=51 // pred_check_branch
        %905 = sbr.rel (%p903) target = $region64
      $region63: #{decoder_block_forward.4} parent=51 // pred_region
        _
      $region64: #{decoder_block_forward.4} parent=51 // pred_fallthru
        _
    $region52: #{decoder_block_forward.4} parent=5 // pred_fallthru
      _
    %p906 = scmp.le.s32.totalorder 2, %s17
    // Predicated region
    $region65: #{decoder_block_forward.4} parent=5 // pred_check
      %p907 = pneg %p906
    $region66: #{decoder_block_forward.4} parent=5 // pred_check_branch
      %909 = sbr.rel (%p907) target = $region68
    $region67: #{decoder_block_forward.4} parent=5 // pred_region
      %s910 = ssub.s32 %s17, 2
      // Predicated region
      $region69: #{decoder_block_forward.4} parent=67 // pred_check
        %p911 = pneg %p240
      $region70: #{decoder_block_forward.4} parent=67 // pred_check_branch
        %913 = sbr.rel (%p911) target = $region72
      $region71: #{decoder_block_forward.4} parent=67 // pred_region
        %s914 = smul.u32 16, %s29
        %p915 = scmp.lt.s32.totalorder %s28, 1
        %s916 = scalar_select %p915, %s28, 1
        %p917 = scmp.lt.s32.totalorder %s914, 31
        %s918 = scalar_select %p917, %s914, 31
        %s919 = smul.addr %s916, 32
        %s920 = sadd.s32 %s918, %s919
        %s921 = smul.addr %s920, 8
        %s922 = scalar_lea.vmem %s8, %s921
      $region72: #{decoder_block_forward.4} parent=67 // pred_fallthru
        _
      // Predicated region
      $region73: #{decoder_block_forward.4} parent=67 // pred_check
        %p923 = pneg %p266
      $region74: #{decoder_block_forward.4} parent=67 // pred_check_branch
        %925 = sbr.rel (%p923) target = $region76
      $region75: #{decoder_block_forward.4} parent=67 // pred_region
        %p926 = scmp.lt.s32.totalorder %s28, 1
        %s927 = scalar_select %p926, %s28, 1
        %s928 = smul.addr %s927, 2
        %s929 = scalar_lea.vmem %s9, %s928
      $region76: #{decoder_block_forward.4} parent=67 // pred_fallthru
        _
    $region68: #{decoder_block_forward.4} parent=5 // pred_fallthru
      _
  $region6: #{decoder_block_forward.4} parent=0 // loop_footer
    %s21 = sadd.s32 1, %s17
  $region7: #{decoder_block_forward.4} parent=0 // loop_footer_branch
    %16 = sbr.rel target = $region3
  $region8: #{decoder_block_forward.4} parent=0 // loop_exit
    _

</llo_original>
